<compile_context>
chip_gen: v7x
topology: tpu7x:2x2x1
jax: 0.10.0
libtpu: 0.0.40
codegen_flags: <defaults>
</compile_context>

<pallas_src>
import numpy as np
import jax
import jax.numpy as jnp
from jax import lax
from jax.experimental import pallas as pl
from jax.experimental.pallas import tpu as pltpu  # noqa: F401  (TPU backend)

# ---- static config implied by the module ----------------------------------- #
C_IN, H_IN, W_IN = 4, 16, 16
K = 3
OC1, OC2 = 8, 16
HID, NCLS = 32, 3
POOL = 2
NL = 128                       # lane width of every in-kernel frame / weight slab

H1 = H_IN - K + 1              # 14 : conv1 output side
HP1 = H1 // POOL               # 7
H2 = HP1 - K + 1               # 5  : conv2 output side
HP2 = H2 // POOL               # 2
LIN_IN = OC2 * HP2 * HP2       # 64

# ---- packed weight-slab row offsets (every piece 8-row aligned) ------------- #
R_T1 = 0
N_T1 = C_IN * K * W_IN         # 12 conv1 Toeplitz blocks of (16, 128)   -> 192 rows
R_T2 = R_T1 + N_T1
N_T2 = K * NL                  # 3 conv2 Toeplitz blocks of (128, 128)   -> 384 rows
R_WL = R_T2 + N_T2
N_WL = HP2 * NL                # 2 linear blocks (one per output row h)  -> 256 rows
R_WC = R_WL + N_WL
N_WC = HID                     # classifier block (HID, 128)             -> 32 rows
R_BIAS = R_WC + N_WC           # 4 bias rows (+4 pad)                    -> 8 rows
R_TOTAL = R_BIAS + 8           # 872 rows total


# --------------------------------- kernel ------------------------------------ #

def fused_forward_kernel(x_ref, w_ref, o_ref):
    """Entire FaceDetectModel forward in one kernel.

    x_ref : (B, C_IN, 16, 16) NCHW input (consumed directly, no transpose)
    w_ref : (R_TOTAL, 128)    packed weight/bias slab (see prepare_params)
    o_ref : (B, NCLS)
    """
    f32 = jnp.float32
    B = x_ref.shape[0]
    R = B * H_IN                                   # rows of the stretched frames

    x = x_ref[...]                                 # (B, 4, 16, 16)

    # ---- conv1: 12 accumulating GEMMs contracting over W (Toeplitz weights) ----
    # frame1: acc1[b*16 + y, 8*x + oc] = conv1[b, oc, y, x]   (valid y, x < 14)
    acc1 = jnp.zeros((R, NL), f32)
    for kh in range(K):
        xs = jnp.roll(x, -kh, axis=2) if kh else x          # rows y <- y+kh (per b,c)
        for c in range(C_IN):
            lhs = xs[:, c, :, :].reshape(R, W_IN)           # (B*16, 16), layout-preserving
            r0 = R_T1 + (c * K + kh) * W_IN
            acc1 = acc1 + jnp.dot(lhs, w_ref[r0:r0 + W_IN, :],
                                  preferred_element_type=f32)

    # ---- maxpool1 (2x2/2) then bias + ReLU (per-channel bias commutes) ----
    m = jnp.maximum(acc1, jnp.roll(acc1, -1, axis=0))       # pair rows y, y+1
    m = jnp.maximum(m, jnp.roll(m, -OC1, axis=1))           # pair x, x+1 (8 lanes apart)
    p1 = jnp.maximum(m + w_ref[R_BIAS:R_BIAS + 1, :], 0.0)
    # frame2: p1[b*16 + 2*py, 16*px + c] = pool1[b, c, py, px]   (valid py, px < 7)

    # ---- conv2: 3 accumulating GEMMs contracting over the (px, c) lane axis ----
    acc2 = jnp.zeros((R, NL), f32)
    for kh in range(K):
        lhs = jnp.roll(p1, -2 * kh, axis=0) if kh else p1
        r0 = R_T2 + kh * NL
        acc2 = acc2 + jnp.dot(lhs, w_ref[r0:r0 + NL, :], preferred_element_type=f32)
    # acc2[b*16 + 2*y2, 16*x2 + oc2] = conv2[b, oc2, y2, x2]   (valid y2, x2 < 5)

    # ---- maxpool2 then bias + ReLU ----
    m2 = jnp.maximum(acc2, jnp.roll(acc2, -2, axis=0))      # pair rows 2*y2, 2*y2+2
    m2 = jnp.maximum(m2, jnp.roll(m2, -OC2, axis=1))        # pair x2, x2+1 (16 lanes apart)
    p2 = jnp.maximum(m2 + w_ref[R_BIAS + 1:R_BIAS + 2, :], 0.0)
    # frame3: p2[b*16 + 4*h, 32*w + c2] = pool2[b, c2, h, w]    (h, w in {0,1})

    # ---- flatten (PyTorch (c,h,w) order folded into WL blocks) + linear ----
    hid = jnp.zeros((B, NL), f32)
    for h in range(HP2):
        rows = jnp.concatenate(
            [p2[b * H_IN + 4 * h: b * H_IN + 4 * h + 1, :] for b in range(B)], axis=0)
        hid = hid + jnp.dot(rows, w_ref[R_WL + h * NL:R_WL + (h + 1) * NL, :],
                            preferred_element_type=f32)
    hid = jnp.maximum(hid + w_ref[R_BIAS + 2:R_BIAS + 3, :], 0.0)   # cols >= HID stay 0

    # ---- classifier ----
    logits = jnp.dot(hid[:, :HID], w_ref[R_WC:R_WC + HID, :],
                     preferred_element_type=f32) + w_ref[R_BIAS + 3:R_BIAS + 4, :]
    o_ref[...] = logits[:, :NCLS]


# ------------------------------ host wrappers --------------------------------- #

def fused_forward(x_nchw, w_slab):
    B = x_nchw.shape[0]
    flops = 2 * B * (C_IN * K * H_IN * W_IN * NL        # conv1 Toeplitz GEMMs
                     + K * H_IN * NL * NL                # conv2 Toeplitz GEMMs
                     + HP2 * NL * NL                     # linear
                     + HID * NL)                         # classifier
    bytes_accessed = int(x_nchw.size) * 4 + int(w_slab.size) * 4 + B * NCLS * 4
    # Single invocation, no grid: both operands fully VMEM-resident (< 0.5 MiB).
    return pl.pallas_call(
        fused_forward_kernel,
        out_shape=jax.ShapeDtypeStruct((B, NCLS), jnp.float32),
        cost_estimate=pl.CostEstimate(flops=flops, transcendentals=0,
                                      bytes_accessed=bytes_accessed),
    )(x_nchw, w_slab)


def prepare_params(params):
    """One-time weight prep: fold every layout decision into ONE packed slab."""
    w1, b1, w2, b2, wl, bl, wc, bc = [np.asarray(p, dtype=np.float32) for p in params]
    assert w1.shape == (OC1, C_IN, K, K) and b1.shape == (OC1,)
    assert w2.shape == (OC2, OC1, K, K) and b2.shape == (OC2,)
    assert wl.shape == (HID, LIN_IN) and bl.shape == (HID,)
    assert wc.shape == (NCLS, HID) and bc.shape == (NCLS,)

    slab = np.zeros((R_TOTAL, NL), np.float32)

    # conv1 Toeplitz blocks: block (c, kh); T[w_in, 8*x + oc] = w1[oc, c, kh, w_in - x]
    for c in range(C_IN):
        for kh in range(K):
            blk = slab[R_T1 + (c * K + kh) * W_IN: R_T1 + (c * K + kh + 1) * W_IN]
            for xo in range(W_IN):
                for kw in range(K):
                    w_in = xo + kw
                    if w_in < W_IN:
                        blk[w_in, OC1 * xo: OC1 * xo + OC1] = w1[:, c, kh, kw]

    # conv2 Toeplitz blocks: block kh; T2[16*px + c, 16*x2 + oc2] = w2[oc2, c, kh, px - x2]
    for kh in range(K):
        blk = slab[R_T2 + kh * NL: R_T2 + (kh + 1) * NL]
        for x2 in range(NL // 16):
            for kw in range(K):
                px = x2 + kw
                if px < NL // 16:
                    for c in range(OC1):
                        blk[16 * px + c, 16 * x2: 16 * x2 + OC2] = w2[:, c, kh, kw]

    # linear blocks (one per output row h); WL_h[32*w + c2, j] = wl[j, c2*4 + h*2 + w]
    for h in range(HP2):
        blk = slab[R_WL + h * NL: R_WL + (h + 1) * NL]
        for w in range(HP2):
            for c2 in range(OC2):
                feat = c2 * (HP2 * HP2) + h * HP2 + w
                blk[32 * w + c2, :HID] = wl[:, feat]

    # classifier (pre-transposed) and bias rows
    slab[R_WC:R_WC + HID, :NCLS] = wc.T
    lanes = np.arange(NL)
    slab[R_BIAS + 0, :] = b1[lanes % OC1]          # conv1 bias, frame1 lane order
    slab[R_BIAS + 1, :] = b2[lanes % OC2]          # conv2 bias, frame2' lane order
    slab[R_BIAS + 2, :HID] = bl
    slab[R_BIAS + 3, :NCLS] = bc
    return jnp.asarray(slab)


@jax.jit
def face_detect_forward(x_nchw, w_slab):
    """Pallas-backed forward pass matching FaceDetectModel.forward (no host layout ops)."""
    return fused_forward(x_nchw.astype(jnp.float32), w_slab)


# ------------------------------ pure-JAX reference ---------------------------- #

def reference_forward(x, params):
    w1, b1, w2, b2, wl, bl, wc, bc = params
    dn = ('NCHW', 'OIHW', 'NCHW')
    neg_inf = jnp.array(-jnp.inf, dtype=x.dtype)
    y = lax.conv_general_dilated(x, w1, (1, 1), 'VALID', dimension_numbers=dn)
    y = jnp.maximum(y + b1[None, :, None, None], 0.0)
    y = lax.reduce_window(y, neg_inf, lax.max, (1, 1, 2, 2), (1, 1, 2, 2), 'VALID')
    y = lax.conv_general_dilated(y, w2, (1, 1), 'VALID', dimension_numbers=dn)
    y = jnp.maximum(y + b2[None, :, None, None], 0.0)
    y = lax.reduce_window(y, neg_inf, lax.max, (1, 1, 2, 2), (1, 1, 2, 2), 'VALID')
    y = y.reshape(y.shape[0], -1)
    y = jnp.maximum(y @ wl.T + bl, 0.0)
    return y @ wc.T + bc


# ----------------------------------- main ------------------------------------- #

if __name__ == "__main__":
    B = 2
    key = jax.random.PRNGKey(0)
    ks = jax.random.split(key, 9)
    x = jax.random.normal(ks[0], (B, C_IN, H_IN, W_IN), jnp.float32)
    w1 = 0.1 * jax.random.normal(ks[1], (OC1, C_IN, K, K), jnp.float32)
    b1 = 0.1 * jax.random.normal(ks[2], (OC1,), jnp.float32)
    w2 = 0.1 * jax.random.normal(ks[3], (OC2, OC1, K, K), jnp.float32)
    b2 = 0.1 * jax.random.normal(ks[4], (OC2,), jnp.float32)
    wl = 0.1 * jax.random.normal(ks[5], (HID, LIN_IN), jnp.float32)
    bl = 0.1 * jax.random.normal(ks[6], (HID,), jnp.float32)
    wc = 0.1 * jax.random.normal(ks[7], (NCLS, HID), jnp.float32)
    bc = 0.1 * jax.random.normal(ks[8], (NCLS,), jnp.float32)
    params = (w1, b1, w2, b2, wl, bl, wc, bc)

    w_slab = prepare_params(params)                      # one-time weight packing
    out = jax.block_until_ready(face_detect_forward(x, w_slab))
    ref = jax.block_until_ready(reference_forward(x, params))
    assert out.shape == (B, NCLS) and out.dtype == jnp.float32
    if not bool(jnp.allclose(out, ref, rtol=2e-2, atol=2e-2)):
        raise AssertionError("Pallas output does not match pure-JAX reference")
    print("KERNEL_OK")
</pallas_src>

<mosaic_0001>
module attributes {stable_mosaic.version = 11 : i64} {
  func.func @fused_forward_kernel(%arg0: memref<2x4x16x16xf32, #tpu.memory_space<vmem>>, %arg1: memref<872x128xf32, #tpu.memory_space<vmem>>, %arg2: memref<2x3xf32, #tpu.memory_space<vmem>>) attributes {dimension_semantics = [], scalar_prefetch = 0 : i64, scratch_operands = 0 : i64, tpu.core_type = #tpu.core_type<tc>} {
    %c0 = arith.constant 0 : index
    %c0_0 = arith.constant 0 : index
    %c0_1 = arith.constant 0 : index
    %c0_2 = arith.constant 0 : index
    %0 = vector.load %arg0[%c0, %c0_0, %c0_1, %c0_2] : memref<2x4x16x16xf32, #tpu.memory_space<vmem>>, vector<2x4x16x16xf32>
    %cst = arith.constant 0.000000e+00 : f32
    %1 = vector.broadcast %cst : f32 to vector<32x128xf32>
    %2 = vector.extract_strided_slice %0 {offsets = [0, 0, 0, 0], sizes = [2, 1, 16, 16], strides = [1, 1, 1, 1]} : vector<2x4x16x16xf32> to vector<2x1x16x16xf32>
    %3 = vector.shape_cast %2 : vector<2x1x16x16xf32> to vector<2x16x16xf32>
    %4 = vector.shape_cast %3 : vector<2x16x16xf32> to vector<32x16xf32>
    %c0_3 = arith.constant 0 : index
    %c0_4 = arith.constant 0 : index
    %5 = vector.load %arg1[%c0_3, %c0_4] : memref<872x128xf32, #tpu.memory_space<vmem>>, vector<16x128xf32>
    %cst_5 = arith.constant dense<0.000000e+00> : vector<32x128xf32>
    %6 = tpu.matmul %4, %5, %cst_5 {dimension_numbers = #tpu.dot_dimension_numbers<[1], [0], [0], [1], [0, 0, 1, 1], [], []>} : vector<32x16xf32>, vector<16x128xf32>, vector<32x128xf32> -> vector<32x128xf32>
    %7 = arith.addf %1, %6 : vector<32x128xf32>
    %8 = vector.extract_strided_slice %0 {offsets = [0, 1, 0, 0], sizes = [2, 1, 16, 16], strides = [1, 1, 1, 1]} : vector<2x4x16x16xf32> to vector<2x1x16x16xf32>
    %9 = vector.shape_cast %8 : vector<2x1x16x16xf32> to vector<2x16x16xf32>
    %10 = vector.shape_cast %9 : vector<2x16x16xf32> to vector<32x16xf32>
    %c48 = arith.constant 48 : index
    %c0_6 = arith.constant 0 : index
    %11 = vector.load %arg1[%c48, %c0_6] : memref<872x128xf32, #tpu.memory_space<vmem>>, vector<16x128xf32>
    %cst_7 = arith.constant dense<0.000000e+00> : vector<32x128xf32>
    %12 = tpu.matmul %10, %11, %cst_7 {dimension_numbers = #tpu.dot_dimension_numbers<[1], [0], [0], [1], [0, 0, 1, 1], [], []>} : vector<32x16xf32>, vector<16x128xf32>, vector<32x128xf32> -> vector<32x128xf32>
    %13 = arith.addf %7, %12 : vector<32x128xf32>
    %14 = vector.extract_strided_slice %0 {offsets = [0, 2, 0, 0], sizes = [2, 1, 16, 16], strides = [1, 1, 1, 1]} : vector<2x4x16x16xf32> to vector<2x1x16x16xf32>
    %15 = vector.shape_cast %14 : vector<2x1x16x16xf32> to vector<2x16x16xf32>
    %16 = vector.shape_cast %15 : vector<2x16x16xf32> to vector<32x16xf32>
    %c96 = arith.constant 96 : index
    %c0_8 = arith.constant 0 : index
    %17 = vector.load %arg1[%c96, %c0_8] : memref<872x128xf32, #tpu.memory_space<vmem>>, vector<16x128xf32>
    %cst_9 = arith.constant dense<0.000000e+00> : vector<32x128xf32>
    %18 = tpu.matmul %16, %17, %cst_9 {dimension_numbers = #tpu.dot_dimension_numbers<[1], [0], [0], [1], [0, 0, 1, 1], [], []>} : vector<32x16xf32>, vector<16x128xf32>, vector<32x128xf32> -> vector<32x128xf32>
    %19 = arith.addf %13, %18 : vector<32x128xf32>
    %20 = vector.extract_strided_slice %0 {offsets = [0, 3, 0, 0], sizes = [2, 1, 16, 16], strides = [1, 1, 1, 1]} : vector<2x4x16x16xf32> to vector<2x1x16x16xf32>
    %21 = vector.shape_cast %20 : vector<2x1x16x16xf32> to vector<2x16x16xf32>
    %22 = vector.shape_cast %21 : vector<2x16x16xf32> to vector<32x16xf32>
    %c144 = arith.constant 144 : index
    %c0_10 = arith.constant 0 : index
    %23 = vector.load %arg1[%c144, %c0_10] : memref<872x128xf32, #tpu.memory_space<vmem>>, vector<16x128xf32>
    %cst_11 = arith.constant dense<0.000000e+00> : vector<32x128xf32>
    %24 = tpu.matmul %22, %23, %cst_11 {dimension_numbers = #tpu.dot_dimension_numbers<[1], [0], [0], [1], [0, 0, 1, 1], [], []>} : vector<32x16xf32>, vector<16x128xf32>, vector<32x128xf32> -> vector<32x128xf32>
    %25 = arith.addf %19, %24 : vector<32x128xf32>
    %26 = vector.extract_strided_slice %0 {offsets = [0, 0, 1, 0], sizes = [2, 4, 15, 16], strides = [1, 1, 1, 1]} : vector<2x4x16x16xf32> to vector<2x4x15x16xf32>
    %27 = vector.extract_strided_slice %0 {offsets = [0, 0, 0, 0], sizes = [2, 4, 1, 16], strides = [1, 1, 1, 1]} : vector<2x4x16x16xf32> to vector<2x4x1x16xf32>
    %28 = tpu.concatenate %26, %27 in 2 : vector<2x4x15x16xf32>, vector<2x4x1x16xf32> -> vector<2x4x16x16xf32>
    %29 = vector.extract_strided_slice %28 {offsets = [0, 0, 0, 0], sizes = [2, 1, 16, 16], strides = [1, 1, 1, 1]} : vector<2x4x16x16xf32> to vector<2x1x16x16xf32>
    %30 = vector.shape_cast %29 : vector<2x1x16x16xf32> to vector<2x16x16xf32>
    %31 = vector.shape_cast %30 : vector<2x16x16xf32> to vector<32x16xf32>
    %c16 = arith.constant 16 : index
    %c0_12 = arith.constant 0 : index
    %32 = vector.load %arg1[%c16, %c0_12] : memref<872x128xf32, #tpu.memory_space<vmem>>, vector<16x128xf32>
    %cst_13 = arith.constant dense<0.000000e+00> : vector<32x128xf32>
    %33 = tpu.matmul %31, %32, %cst_13 {dimension_numbers = #tpu.dot_dimension_numbers<[1], [0], [0], [1], [0, 0, 1, 1], [], []>} : vector<32x16xf32>, vector<16x128xf32>, vector<32x128xf32> -> vector<32x128xf32>
    %34 = arith.addf %25, %33 : vector<32x128xf32>
    %35 = vector.extract_strided_slice %28 {offsets = [0, 1, 0, 0], sizes = [2, 1, 16, 16], strides = [1, 1, 1, 1]} : vector<2x4x16x16xf32> to vector<2x1x16x16xf32>
    %36 = vector.shape_cast %35 : vector<2x1x16x16xf32> to vector<2x16x16xf32>
    %37 = vector.shape_cast %36 : vector<2x16x16xf32> to vector<32x16xf32>
    %c64 = arith.constant 64 : index
    %c0_14 = arith.constant 0 : index
    %38 = vector.load %arg1[%c64, %c0_14] : memref<872x128xf32, #tpu.memory_space<vmem>>, vector<16x128xf32>
    %cst_15 = arith.constant dense<0.000000e+00> : vector<32x128xf32>
    %39 = tpu.matmul %37, %38, %cst_15 {dimension_numbers = #tpu.dot_dimension_numbers<[1], [0], [0], [1], [0, 0, 1, 1], [], []>} : vector<32x16xf32>, vector<16x128xf32>, vector<32x128xf32> -> vector<32x128xf32>
    %40 = arith.addf %34, %39 : vector<32x128xf32>
    %41 = vector.extract_strided_slice %28 {offsets = [0, 2, 0, 0], sizes = [2, 1, 16, 16], strides = [1, 1, 1, 1]} : vector<2x4x16x16xf32> to vector<2x1x16x16xf32>
    %42 = vector.shape_cast %41 : vector<2x1x16x16xf32> to vector<2x16x16xf32>
    %43 = vector.shape_cast %42 : vector<2x16x16xf32> to vector<32x16xf32>
    %c112 = arith.constant 112 : index
    %c0_16 = arith.constant 0 : index
    %44 = vector.load %arg1[%c112, %c0_16] : memref<872x128xf32, #tpu.memory_space<vmem>>, vector<16x128xf32>
    %cst_17 = arith.constant dense<0.000000e+00> : vector<32x128xf32>
    %45 = tpu.matmul %43, %44, %cst_17 {dimension_numbers = #tpu.dot_dimension_numbers<[1], [0], [0], [1], [0, 0, 1, 1], [], []>} : vector<32x16xf32>, vector<16x128xf32>, vector<32x128xf32> -> vector<32x128xf32>
    %46 = arith.addf %40, %45 : vector<32x128xf32>
    %47 = vector.extract_strided_slice %28 {offsets = [0, 3, 0, 0], sizes = [2, 1, 16, 16], strides = [1, 1, 1, 1]} : vector<2x4x16x16xf32> to vector<2x1x16x16xf32>
    %48 = vector.shape_cast %47 : vector<2x1x16x16xf32> to vector<2x16x16xf32>
    %49 = vector.shape_cast %48 : vector<2x16x16xf32> to vector<32x16xf32>
    %c160 = arith.constant 160 : index
    %c0_18 = arith.constant 0 : index
    %50 = vector.load %arg1[%c160, %c0_18] : memref<872x128xf32, #tpu.memory_space<vmem>>, vector<16x128xf32>
    %cst_19 = arith.constant dense<0.000000e+00> : vector<32x128xf32>
    %51 = tpu.matmul %49, %50, %cst_19 {dimension_numbers = #tpu.dot_dimension_numbers<[1], [0], [0], [1], [0, 0, 1, 1], [], []>} : vector<32x16xf32>, vector<16x128xf32>, vector<32x128xf32> -> vector<32x128xf32>
    %52 = arith.addf %46, %51 : vector<32x128xf32>
    %53 = vector.extract_strided_slice %0 {offsets = [0, 0, 2, 0], sizes = [2, 4, 14, 16], strides = [1, 1, 1, 1]} : vector<2x4x16x16xf32> to vector<2x4x14x16xf32>
    %54 = vector.extract_strided_slice %0 {offsets = [0, 0, 0, 0], sizes = [2, 4, 2, 16], strides = [1, 1, 1, 1]} : vector<2x4x16x16xf32> to vector<2x4x2x16xf32>
    %55 = tpu.concatenate %53, %54 in 2 : vector<2x4x14x16xf32>, vector<2x4x2x16xf32> -> vector<2x4x16x16xf32>
    %56 = vector.extract_strided_slice %55 {offsets = [0, 0, 0, 0], sizes = [2, 1, 16, 16], strides = [1, 1, 1, 1]} : vector<2x4x16x16xf32> to vector<2x1x16x16xf32>
    %57 = vector.shape_cast %56 : vector<2x1x16x16xf32> to vector<2x16x16xf32>
    %58 = vector.shape_cast %57 : vector<2x16x16xf32> to vector<32x16xf32>
    %c32 = arith.constant 32 : index
    %c0_20 = arith.constant 0 : index
    %59 = vector.load %arg1[%c32, %c0_20] : memref<872x128xf32, #tpu.memory_space<vmem>>, vector<16x128xf32>
    %cst_21 = arith.constant dense<0.000000e+00> : vector<32x128xf32>
    %60 = tpu.matmul %58, %59, %cst_21 {dimension_numbers = #tpu.dot_dimension_numbers<[1], [0], [0], [1], [0, 0, 1, 1], [], []>} : vector<32x16xf32>, vector<16x128xf32>, vector<32x128xf32> -> vector<32x128xf32>
    %61 = arith.addf %52, %60 : vector<32x128xf32>
    %62 = vector.extract_strided_slice %55 {offsets = [0, 1, 0, 0], sizes = [2, 1, 16, 16], strides = [1, 1, 1, 1]} : vector<2x4x16x16xf32> to vector<2x1x16x16xf32>
    %63 = vector.shape_cast %62 : vector<2x1x16x16xf32> to vector<2x16x16xf32>
    %64 = vector.shape_cast %63 : vector<2x16x16xf32> to vector<32x16xf32>
    %c80 = arith.constant 80 : index
    %c0_22 = arith.constant 0 : index
    %65 = vector.load %arg1[%c80, %c0_22] : memref<872x128xf32, #tpu.memory_space<vmem>>, vector<16x128xf32>
    %cst_23 = arith.constant dense<0.000000e+00> : vector<32x128xf32>
    %66 = tpu.matmul %64, %65, %cst_23 {dimension_numbers = #tpu.dot_dimension_numbers<[1], [0], [0], [1], [0, 0, 1, 1], [], []>} : vector<32x16xf32>, vector<16x128xf32>, vector<32x128xf32> -> vector<32x128xf32>
    %67 = arith.addf %61, %66 : vector<32x128xf32>
    %68 = vector.extract_strided_slice %55 {offsets = [0, 2, 0, 0], sizes = [2, 1, 16, 16], strides = [1, 1, 1, 1]} : vector<2x4x16x16xf32> to vector<2x1x16x16xf32>
    %69 = vector.shape_cast %68 : vector<2x1x16x16xf32> to vector<2x16x16xf32>
    %70 = vector.shape_cast %69 : vector<2x16x16xf32> to vector<32x16xf32>
    %c128 = arith.constant 128 : index
    %c0_24 = arith.constant 0 : index
    %71 = vector.load %arg1[%c128, %c0_24] : memref<872x128xf32, #tpu.memory_space<vmem>>, vector<16x128xf32>
    %cst_25 = arith.constant dense<0.000000e+00> : vector<32x128xf32>
    %72 = tpu.matmul %70, %71, %cst_25 {dimension_numbers = #tpu.dot_dimension_numbers<[1], [0], [0], [1], [0, 0, 1, 1], [], []>} : vector<32x16xf32>, vector<16x128xf32>, vector<32x128xf32> -> vector<32x128xf32>
    %73 = arith.addf %67, %72 : vector<32x128xf32>
    %74 = vector.extract_strided_slice %55 {offsets = [0, 3, 0, 0], sizes = [2, 1, 16, 16], strides = [1, 1, 1, 1]} : vector<2x4x16x16xf32> to vector<2x1x16x16xf32>
    %75 = vector.shape_cast %74 : vector<2x1x16x16xf32> to vector<2x16x16xf32>
    %76 = vector.shape_cast %75 : vector<2x16x16xf32> to vector<32x16xf32>
    %c176 = arith.constant 176 : index
    %c0_26 = arith.constant 0 : index
    %77 = vector.load %arg1[%c176, %c0_26] : memref<872x128xf32, #tpu.memory_space<vmem>>, vector<16x128xf32>
    %cst_27 = arith.constant dense<0.000000e+00> : vector<32x128xf32>
    %78 = tpu.matmul %76, %77, %cst_27 {dimension_numbers = #tpu.dot_dimension_numbers<[1], [0], [0], [1], [0, 0, 1, 1], [], []>} : vector<32x16xf32>, vector<16x128xf32>, vector<32x128xf32> -> vector<32x128xf32>
    %79 = arith.addf %73, %78 : vector<32x128xf32>
    %80 = vector.extract_strided_slice %79 {offsets = [1, 0], sizes = [31, 128], strides = [1, 1]} : vector<32x128xf32> to vector<31x128xf32>
    %81 = vector.extract_strided_slice %79 {offsets = [0, 0], sizes = [1, 128], strides = [1, 1]} : vector<32x128xf32> to vector<1x128xf32>
    %82 = tpu.concatenate %80, %81 in 0 : vector<31x128xf32>, vector<1x128xf32> -> vector<32x128xf32>
    %83 = arith.maximumf %79, %82 : vector<32x128xf32>
    %84 = vector.extract_strided_slice %83 {offsets = [0, 8], sizes = [32, 120], strides = [1, 1]} : vector<32x128xf32> to vector<32x120xf32>
    %85 = vector.extract_strided_slice %83 {offsets = [0, 0], sizes = [32, 8], strides = [1, 1]} : vector<32x128xf32> to vector<32x8xf32>
    %86 = tpu.concatenate %84, %85 in 1 : vector<32x120xf32>, vector<32x8xf32> -> vector<32x128xf32>
    %87 = arith.maximumf %83, %86 : vector<32x128xf32>
    %c864 = arith.constant 864 : index
    %c0_28 = arith.constant 0 : index
    %88 = vector.load %arg1[%c864, %c0_28] : memref<872x128xf32, #tpu.memory_space<vmem>>, vector<1x128xf32>
    %89 = vector.broadcast %88 : vector<1x128xf32> to vector<32x128xf32>
    %90 = arith.addf %87, %89 : vector<32x128xf32>
    %cst_29 = arith.constant 0.000000e+00 : f32
    %91 = vector.broadcast %cst_29 : f32 to vector<32x128xf32>
    %92 = arith.maximumf %90, %91 : vector<32x128xf32>
    %cst_30 = arith.constant 0.000000e+00 : f32
    %93 = vector.broadcast %cst_30 : f32 to vector<32x128xf32>
    %c192 = arith.constant 192 : index
    %c0_31 = arith.constant 0 : index
    %94 = vector.load %arg1[%c192, %c0_31] : memref<872x128xf32, #tpu.memory_space<vmem>>, vector<128x128xf32>
    %cst_32 = arith.constant dense<0.000000e+00> : vector<32x128xf32>
    %95 = tpu.matmul %92, %94, %cst_32 {dimension_numbers = #tpu.dot_dimension_numbers<[1], [0], [0], [1], [0, 0, 1, 1], [], []>} : vector<32x128xf32>, vector<128x128xf32>, vector<32x128xf32> -> vector<32x128xf32>
    %96 = arith.addf %93, %95 : vector<32x128xf32>
    %97 = vector.extract_strided_slice %92 {offsets = [2, 0], sizes = [30, 128], strides = [1, 1]} : vector<32x128xf32> to vector<30x128xf32>
    %98 = vector.extract_strided_slice %92 {offsets = [0, 0], sizes = [2, 128], strides = [1, 1]} : vector<32x128xf32> to vector<2x128xf32>
    %99 = tpu.concatenate %97, %98 in 0 : vector<30x128xf32>, vector<2x128xf32> -> vector<32x128xf32>
    %c320 = arith.constant 320 : index
    %c0_33 = arith.constant 0 : index
    %100 = vector.load %arg1[%c320, %c0_33] : memref<872x128xf32, #tpu.memory_space<vmem>>, vector<128x128xf32>
    %cst_34 = arith.constant dense<0.000000e+00> : vector<32x128xf32>
    %101 = tpu.matmul %99, %100, %cst_34 {dimension_numbers = #tpu.dot_dimension_numbers<[1], [0], [0], [1], [0, 0, 1, 1], [], []>} : vector<32x128xf32>, vector<128x128xf32>, vector<32x128xf32> -> vector<32x128xf32>
    %102 = arith.addf %96, %101 : vector<32x128xf32>
    %103 = vector.extract_strided_slice %92 {offsets = [4, 0], sizes = [28, 128], strides = [1, 1]} : vector<32x128xf32> to vector<28x128xf32>
    %104 = vector.extract_strided_slice %92 {offsets = [0, 0], sizes = [4, 128], strides = [1, 1]} : vector<32x128xf32> to vector<4x128xf32>
    %105 = tpu.concatenate %103, %104 in 0 : vector<28x128xf32>, vector<4x128xf32> -> vector<32x128xf32>
    %c448 = arith.constant 448 : index
    %c0_35 = arith.constant 0 : index
    %106 = vector.load %arg1[%c448, %c0_35] : memref<872x128xf32, #tpu.memory_space<vmem>>, vector<128x128xf32>
    %cst_36 = arith.constant dense<0.000000e+00> : vector<32x128xf32>
    %107 = tpu.matmul %105, %106, %cst_36 {dimension_numbers = #tpu.dot_dimension_numbers<[1], [0], [0], [1], [0, 0, 1, 1], [], []>} : vector<32x128xf32>, vector<128x128xf32>, vector<32x128xf32> -> vector<32x128xf32>
    %108 = arith.addf %102, %107 : vector<32x128xf32>
    %109 = vector.extract_strided_slice %108 {offsets = [2, 0], sizes = [30, 128], strides = [1, 1]} : vector<32x128xf32> to vector<30x128xf32>
    %110 = vector.extract_strided_slice %108 {offsets = [0, 0], sizes = [2, 128], strides = [1, 1]} : vector<32x128xf32> to vector<2x128xf32>
    %111 = tpu.concatenate %109, %110 in 0 : vector<30x128xf32>, vector<2x128xf32> -> vector<32x128xf32>
    %112 = arith.maximumf %108, %111 : vector<32x128xf32>
    %113 = vector.extract_strided_slice %112 {offsets = [0, 16], sizes = [32, 112], strides = [1, 1]} : vector<32x128xf32> to vector<32x112xf32>
    %114 = vector.extract_strided_slice %112 {offsets = [0, 0], sizes = [32, 16], strides = [1, 1]} : vector<32x128xf32> to vector<32x16xf32>
    %115 = tpu.concatenate %113, %114 in 1 : vector<32x112xf32>, vector<32x16xf32> -> vector<32x128xf32>
    %116 = arith.maximumf %112, %115 : vector<32x128xf32>
    %c865 = arith.constant 865 : index
    %c0_37 = arith.constant 0 : index
    %117 = vector.load %arg1[%c865, %c0_37] : memref<872x128xf32, #tpu.memory_space<vmem>>, vector<1x128xf32>
    %118 = vector.broadcast %117 : vector<1x128xf32> to vector<32x128xf32>
    %119 = arith.addf %116, %118 : vector<32x128xf32>
    %cst_38 = arith.constant 0.000000e+00 : f32
    %120 = vector.broadcast %cst_38 : f32 to vector<32x128xf32>
    %121 = arith.maximumf %119, %120 : vector<32x128xf32>
    %cst_39 = arith.constant 0.000000e+00 : f32
    %122 = vector.broadcast %cst_39 : f32 to vector<2x128xf32>
    %123 = vector.extract_strided_slice %121 {offsets = [0, 0], sizes = [1, 128], strides = [1, 1]} : vector<32x128xf32> to vector<1x128xf32>
    %124 = vector.extract_strided_slice %121 {offsets = [16, 0], sizes = [1, 128], strides = [1, 1]} : vector<32x128xf32> to vector<1x128xf32>
    %125 = tpu.concatenate %123, %124 in 0 : vector<1x128xf32>, vector<1x128xf32> -> vector<2x128xf32>
    %c576 = arith.constant 576 : index
    %c0_40 = arith.constant 0 : index
    %126 = vector.load %arg1[%c576, %c0_40] : memref<872x128xf32, #tpu.memory_space<vmem>>, vector<128x128xf32>
    %cst_41 = arith.constant dense<0.000000e+00> : vector<2x128xf32>
    %127 = tpu.matmul %125, %126, %cst_41 {dimension_numbers = #tpu.dot_dimension_numbers<[1], [0], [0], [1], [0, 0, 1, 1], [], []>} : vector<2x128xf32>, vector<128x128xf32>, vector<2x128xf32> -> vector<2x128xf32>
    %128 = arith.addf %122, %127 : vector<2x128xf32>
    %129 = vector.extract_strided_slice %121 {offsets = [4, 0], sizes = [1, 128], strides = [1, 1]} : vector<32x128xf32> to vector<1x128xf32>
    %130 = vector.extract_strided_slice %121 {offsets = [20, 0], sizes = [1, 128], strides = [1, 1]} : vector<32x128xf32> to vector<1x128xf32>
    %131 = tpu.concatenate %129, %130 in 0 : vector<1x128xf32>, vector<1x128xf32> -> vector<2x128xf32>
    %c704 = arith.constant 704 : index
    %c0_42 = arith.constant 0 : index
    %132 = vector.load %arg1[%c704, %c0_42] : memref<872x128xf32, #tpu.memory_space<vmem>>, vector<128x128xf32>
    %cst_43 = arith.constant dense<0.000000e+00> : vector<2x128xf32>
    %133 = tpu.matmul %131, %132, %cst_43 {dimension_numbers = #tpu.dot_dimension_numbers<[1], [0], [0], [1], [0, 0, 1, 1], [], []>} : vector<2x128xf32>, vector<128x128xf32>, vector<2x128xf32> -> vector<2x128xf32>
    %134 = arith.addf %128, %133 : vector<2x128xf32>
    %c866 = arith.constant 866 : index
    %c0_44 = arith.constant 0 : index
    %135 = vector.load %arg1[%c866, %c0_44] : memref<872x128xf32, #tpu.memory_space<vmem>>, vector<1x128xf32>
    %136 = vector.broadcast %135 : vector<1x128xf32> to vector<2x128xf32>
    %137 = arith.addf %134, %136 : vector<2x128xf32>
    %cst_45 = arith.constant 0.000000e+00 : f32
    %138 = vector.broadcast %cst_45 : f32 to vector<2x128xf32>
    %139 = arith.maximumf %137, %138 : vector<2x128xf32>
    %140 = vector.extract_strided_slice %139 {offsets = [0, 0], sizes = [2, 32], strides = [1, 1]} : vector<2x128xf32> to vector<2x32xf32>
    %c832 = arith.constant 832 : index
    %c0_46 = arith.constant 0 : index
    %141 = vector.load %arg1[%c832, %c0_46] : memref<872x128xf32, #tpu.memory_space<vmem>>, vector<32x128xf32>
    %cst_47 = arith.constant dense<0.000000e+00> : vector<2x128xf32>
    %142 = tpu.matmul %140, %141, %cst_47 {dimension_numbers = #tpu.dot_dimension_numbers<[1], [0], [0], [1], [0, 0, 1, 1], [], []>} : vector<2x32xf32>, vector<32x128xf32>, vector<2x128xf32> -> vector<2x128xf32>
    %c867 = arith.constant 867 : index
    %c0_48 = arith.constant 0 : index
    %143 = vector.load %arg1[%c867, %c0_48] : memref<872x128xf32, #tpu.memory_space<vmem>>, vector<1x128xf32>
    %144 = vector.broadcast %143 : vector<1x128xf32> to vector<2x128xf32>
    %145 = arith.addf %142, %144 : vector<2x128xf32>
    %146 = vector.extract_strided_slice %145 {offsets = [0, 0], sizes = [2, 3], strides = [1, 1]} : vector<2x128xf32> to vector<2x3xf32>
    %c0_49 = arith.constant 0 : index
    %c0_50 = arith.constant 0 : index
    %147 = vector.load %arg2[%c0_49, %c0_50] : memref<2x3xf32, #tpu.memory_space<vmem>>, vector<2x3xf32>
    tpu.vector_store %arg2[%c0_49, %c0_50], %146 {strides = array<i32>} : memref<2x3xf32, #tpu.memory_space<vmem>>, vector<2x3xf32>,
    return
  }
}

</mosaic_0001>

<llo_original>
// kernel: face_detect_forward.1
$region0: #{face_detect_forward.1}
  #allocation0 [shape = 'u32[]', space=smem, size = 0x4, offset = 0x4, fixed_abs, tag = 'smem constant byte address 0x4 - core index']
  #allocation1 [shape = 'u32[144,128]{1,0:T(1,128)}', space=vmem, size = 0x12000, scoped, tag = 'internal scratch']
  %s0 = inlined_call_operand.hbm [shape: f32[2,4,16,16], index: 0, kind: input, shape index: {}]
  %s1 = inlined_call_operand.hbm [shape: f32[872,128], index: 1, kind: input, shape index: {}]
  %s2 = inlined_call_operand.hbm [shape: f32[2,3], index: 2, kind: output, shape index: {}]
  %s3 = sld [smem:[#allocation0]]
  $region26: #{face_detect_forward.1} parent=0
    _
  %s5 = ssub.s32 1, %s3
  %s6 = scalar_select 0, %s5, %s3
  $region1: #{face_detect_forward.1} parent=0
    #allocation2 [shape = 'u8[65536]{0}', space=vmem, size = 0x10000, scoped, tag = 'input window, operand 0, single buffered']
    #allocation3 [shape = 's32[1]{0}', space=sflag, size = 0x4, scoped, tag = 'scoped memory for face_detect_forward.1']
    #allocation4 [shape = 's32[1]{0}', space=sflag, size = 0x4, scoped, tag = 'scoped memory for face_detect_forward.1']
    #allocation5 [shape = 'u8[446464]{0}', space=vmem, size = 0x6d000, scoped, tag = 'input window, operand 1, single buffered']
    #allocation6 [shape = 's32[1]{0}', space=sflag, size = 0x4, scoped, tag = 'scoped memory for face_detect_forward.1']
    #allocation7 [shape = 'u8[1024]{0}', space=vmem, size = 0x400, scoped, tag = 'output window, operand 0, single buffered']
    %7 = vsyncpa [#allocation3], 0
    %8 = vsyncpa [#allocation6], 0
    %9 = vsyncpa [#allocation4], 0
    // Predicated region
    $region2: #{face_detect_forward.1} parent=1 // pred_check
      _
    $region3: #{face_detect_forward.1} parent=1 // pred_check_branch
      %11 = sbr.rel (0) target = $region5
    $region4: #{face_detect_forward.1} parent=1 // pred_region
      %s13 = ssub.s32 2048, 2048
      %14 = vsyncadd [#allocation3], %s13
      %s15 = sshll.u32 [#allocation2], 4
      %s16 = int_to_ptr.vmem [resolvable:$true] %s15
      %21 = dma.hbm_to_vmem [thread:$0]  %s0, 2048, %s16, [#allocation3], 128, 128, 8
    $region5: #{face_detect_forward.1} parent=1 // pred_fallthru
      _
    // Predicated region
    $region6: #{face_detect_forward.1} parent=1 // pred_check
      _
    $region7: #{face_detect_forward.1} parent=1 // pred_check_branch
      %23 = sbr.rel (0) target = $region9
    $region8: #{face_detect_forward.1} parent=1 // pred_region
      %s25 = ssub.s32 13952, 13952
      %26 = vsyncadd [#allocation6], %s25
      %s27 = sshll.u32 [#allocation5], 4
      %s28 = int_to_ptr.vmem [resolvable:$true] %s27
      %33 = dma.hbm_to_vmem [thread:$0]  %s1, 13952, %s28, [#allocation6], 128, 128, 8
    $region9: #{face_detect_forward.1} parent=1 // pred_fallthru
      _
    // Predicated region
    $region10: #{face_detect_forward.1} parent=1 // pred_check
      _
    $region11: #{face_detect_forward.1} parent=1 // pred_check_branch
      %35 = sbr.rel (0) target = $region13
    $region12: #{face_detect_forward.1} parent=1 // pred_region
      %36 = dma.done [#allocation3], 2048
    $region13: #{face_detect_forward.1} parent=1 // pred_fallthru
      _
    // Predicated region
    $region14: #{face_detect_forward.1} parent=1 // pred_check
      _
    $region15: #{face_detect_forward.1} parent=1 // pred_check_branch
      %38 = sbr.rel (0) target = $region17
    $region16: #{face_detect_forward.1} parent=1 // pred_region
      %39 = dma.done [#allocation6], 13952
    $region17: #{face_detect_forward.1} parent=1 // pred_fallthru
      _
    %v40 = vld [vmem:[#allocation2] sm:$0xff]
    %v41 = vld [vmem:[#allocation2 + $0x8] sm:$0xff]
    %v42 = vld [vmem:[#allocation2 + $0x10] sm:$0xff]
    %v43 = vld [vmem:[#allocation2 + $0x18] sm:$0xff]
    %v44 = vld [vmem:[#allocation2 + $0x20] sm:$0xff]
    %v45 = vld [vmem:[#allocation2 + $0x28] sm:$0xff]
    %v46 = vld [vmem:[#allocation2 + $0x30] sm:$0xff]
    %v47 = vld [vmem:[#allocation2 + $0x38] sm:$0xff]
    %v48 = vld [vmem:[#allocation2 + $0x40] sm:$0xff]
    %v49 = vld [vmem:[#allocation2 + $0x48] sm:$0xff]
    %v50 = vld [vmem:[#allocation2 + $0x50] sm:$0xff]
    %v51 = vld [vmem:[#allocation2 + $0x58] sm:$0xff]
    %v52 = vld [vmem:[#allocation2 + $0x60] sm:$0xff]
    %v53 = vld [vmem:[#allocation2 + $0x68] sm:$0xff]
    %v54 = vld [vmem:[#allocation2 + $0x70] sm:$0xff]
    %v55 = vld [vmem:[#allocation2 + $0x78] sm:$0xff]
    %v56 = vld [vmem:[#allocation5] sm:$0xff]
    %v57 = vld [vmem:[#allocation5 + $0x8] sm:$0xff]
    %v58 = vld [vmem:[#allocation5 + $0x30] sm:$0xff]
    %v59 = vld [vmem:[#allocation5 + $0x38] sm:$0xff]
    %vm60 = vcmask 130048
    %v62 = vsel %vm60, %v42, 0
    %v65 = vsel %vm60, %v43, 0
    %v68 = vsel %vm60, %v50, 0
    %v71 = vsel %vm60, %v51, 0
    %73 = vmatprep.subr.mxu0 0.0
    %74 = vmatpush1.msra.mxu0 %v58
    %75 = vmatprep.subr.mxu0 0.0
    %76 = vmatpush1.msra.mxu0 %v59
    %77 = vmatprep.subr.mxu0 0.0
    %78 = vmatpush1.msra.mxu0 0.0
    %79 = vmatprep.subr.mxu0 0.0
    %80 = vmatpush1.msra.mxu0 0.0
    %81 = vmatprep.subr.mxu0 0.0
    %82 = vmatpush1.msra.mxu0 0.0
    %83 = vmatprep.subr.mxu0 0.0
    %84 = vmatpush1.msra.mxu0 0.0
    %85 = vmatprep.subr.mxu0 0.0
    %86 = vmatpush1.msra.mxu0 0.0
    %87 = vmatprep.subr.mxu0 0.0
    %88 = vmatpush1.msra.mxu0 0.0
    %89 = vmatprep.subr.mxu0 0.0
    %90 = vmatpush1.msra.mxu0 0.0
    %91 = vmatprep.subr.mxu0 0.0
    %92 = vmatpush1.msra.mxu0 0.0
    %93 = vmatprep.subr.mxu0 0.0
    %94 = vmatpush1.msra.mxu0 0.0
    %95 = vmatprep.subr.mxu0 0.0
    %96 = vmatpush1.msra.mxu0 0.0
    %97 = vmatprep.subr.mxu0 0.0
    %98 = vmatpush1.msra.mxu0 0.0
    %99 = vmatprep.subr.mxu0 0.0
    %100 = vmatpush1.msra.mxu0 0.0
    %101 = vmatprep.subr.mxu0 0.0
    %102 = vmatpush1.msra.mxu0 0.0
    %103 = vmatprep.subr.mxu0 0.0
    %104 = vmatpush1.msra.mxu0 0.0
    %105 = vmatprep.subr.mxu0 0.0
    %106 = vmatpush1.msra.mxu0 0.0
    %107 = vmatprep.subr.mxu0 0.0
    %108 = vmatpush1.msra.mxu0 0.0
    %109 = vmatprep.subr.mxu0 0.0
    %110 = vmatpush1.msra.mxu0 0.0
    %111 = vmatprep.subr.mxu0 0.0
    %112 = vmatpush1.msra.mxu0 0.0
    %113 = vmatprep.subr.mxu0 0.0
    %114 = vmatpush1.msra.mxu0 0.0
    %115 = vmatprep.subr.mxu0 0.0
    %116 = vmatpush1.msra.mxu0 0.0
    %117 = vmatprep.subr.mxu0 0.0
    %118 = vmatpush1.msra.mxu0 0.0
    %119 = vmatprep.subr.mxu0 0.0
    %120 = vmatpush1.msra.mxu0 0.0
    %121 = vmatprep.subr.mxu0 0.0
    %122 = vmatpush1.msra.mxu0 0.0
    %123 = vmatprep.subr.mxu0 0.0
    %124 = vmatpush1.msra.mxu0 0.0
    %125 = vmatprep.subr.mxu0 0.0
    %126 = vmatpush1.msra.mxu0 0.0
    %127 = vmatprep.subr.mxu0 0.0
    %128 = vmatpush1.msra.mxu0 0.0
    %129 = vmatprep.subr.mxu0 0.0
    %130 = vmatpush1.msra.mxu0 0.0
    %131 = vmatprep.subr.mxu0 0.0
    %132 = vmatpush1.msra.mxu0 0.0
    %133 = vmatprep.subr.mxu0 0.0
    %134 = vmatpush1.msra.mxu0 0.0
    %135 = vmatprep.subr.mxu0 0.0
    %136 = vmatpush1.msra.mxu0 0.0
    %137 = vmatprep.mubr.f32.mxu0 0.0
    %138 = vmatmul.mubr.f32.gmra.mrb[0].mxu0 %v62
    %v139 = vpop.f32.mrb[0].mxu0
    %v140 = vadd.f32 0.0, %v139
    %v141 = vpop.f32.mrb[0].mxu0
    %142 = vmatprep.mubr.f32.mxu0 0.0
    %143 = vmatmul.mubr.f32.gmra.mrb[0].mxu0 %v65
    %v144 = vpop.f32.mrb[0].mxu0
    %v145 = vadd.f32 0.0, %v144
    %v146 = vpop.f32.mrb[0].mxu0
    %147 = vmatprep.mubr.f32.mxu0 0.0
    %148 = vmatmul.mubr.f32.gmra.mrb[0].mxu0 %v68
    %v149 = vpop.f32.mrb[0].mxu0
    %v150 = vadd.f32 0.0, %v149
    %v151 = vpop.f32.mrb[0].mxu0
    %152 = vmatprep.mubr.f32.mxu0 0.0
    %153 = vmatmul.mubr.f32.gmra.mrb[0].mxu0 %v71
    %v154 = vpop.f32.mrb[0].mxu0
    %v155 = vadd.f32 0.0, %v154
    %v156 = vpop.f32.mrb[0].mxu0
    %157 = vdwg.mxu0
    %v159 = vsel %vm60, %v40, 0
    %v162 = vsel %vm60, %v41, 0
    %v165 = vsel %vm60, %v48, 0
    %v168 = vsel %vm60, %v49, 0
    %170 = vmatprep.subr.mxu0 0.0
    %171 = vmatpush1.msra.mxu0 %v56
    %172 = vmatprep.subr.mxu0 0.0
    %173 = vmatpush1.msra.mxu0 %v57
    %174 = vmatprep.subr.mxu0 0.0
    %175 = vmatpush1.msra.mxu0 0.0
    %176 = vmatprep.subr.mxu0 0.0
    %177 = vmatpush1.msra.mxu0 0.0
    %178 = vmatprep.subr.mxu0 0.0
    %179 = vmatpush1.msra.mxu0 0.0
    %180 = vmatprep.subr.mxu0 0.0
    %181 = vmatpush1.msra.mxu0 0.0
    %182 = vmatprep.subr.mxu0 0.0
    %183 = vmatpush1.msra.mxu0 0.0
    %184 = vmatprep.subr.mxu0 0.0
    %185 = vmatpush1.msra.mxu0 0.0
    %186 = vmatprep.subr.mxu0 0.0
    %187 = vmatpush1.msra.mxu0 0.0
    %188 = vmatprep.subr.mxu0 0.0
    %189 = vmatpush1.msra.mxu0 0.0
    %190 = vmatprep.subr.mxu0 0.0
    %191 = vmatpush1.msra.mxu0 0.0
    %192 = vmatprep.subr.mxu0 0.0
    %193 = vmatpush1.msra.mxu0 0.0
    %194 = vmatprep.subr.mxu0 0.0
    %195 = vmatpush1.msra.mxu0 0.0
    %196 = vmatprep.subr.mxu0 0.0
    %197 = vmatpush1.msra.mxu0 0.0
    %198 = vmatprep.subr.mxu0 0.0
    %199 = vmatpush1.msra.mxu0 0.0
    %200 = vmatprep.subr.mxu0 0.0
    %201 = vmatpush1.msra.mxu0 0.0
    %202 = vmatprep.subr.mxu0 0.0
    %203 = vmatpush1.msra.mxu0 0.0
    %204 = vmatprep.subr.mxu0 0.0
    %205 = vmatpush1.msra.mxu0 0.0
    %206 = vmatprep.subr.mxu0 0.0
    %207 = vmatpush1.msra.mxu0 0.0
    %208 = vmatprep.subr.mxu0 0.0
    %209 = vmatpush1.msra.mxu0 0.0
    %210 = vmatprep.subr.mxu0 0.0
    %211 = vmatpush1.msra.mxu0 0.0
    %212 = vmatprep.subr.mxu0 0.0
    %213 = vmatpush1.msra.mxu0 0.0
    %214 = vmatprep.subr.mxu0 0.0
    %215 = vmatpush1.msra.mxu0 0.0
    %216 = vmatprep.subr.mxu0 0.0
    %217 = vmatpush1.msra.mxu0 0.0
    %218 = vmatprep.subr.mxu0 0.0
    %219 = vmatpush1.msra.mxu0 0.0
    %220 = vmatprep.subr.mxu0 0.0
    %221 = vmatpush1.msra.mxu0 0.0
    %222 = vmatprep.subr.mxu0 0.0
    %223 = vmatpush1.msra.mxu0 0.0
    %224 = vmatprep.subr.mxu0 0.0
    %225 = vmatpush1.msra.mxu0 0.0
    %226 = vmatprep.subr.mxu0 0.0
    %227 = vmatpush1.msra.mxu0 0.0
    %228 = vmatprep.subr.mxu0 0.0
    %229 = vmatpush1.msra.mxu0 0.0
    %230 = vmatprep.subr.mxu0 0.0
    %231 = vmatpush1.msra.mxu0 0.0
    %232 = vmatprep.subr.mxu0 0.0
    %233 = vmatpush1.msra.mxu0 0.0
    %234 = vmatprep.mubr.f32.mxu0 0.0
    %235 = vmatmul.mubr.f32.gmra.mrb[0].mxu0 %v159
    %v236 = vpop.f32.mrb[0].mxu0
    %v237 = vadd.f32 %v140, %v236
    %v238 = vpop.f32.mrb[0].mxu0
    %239 = vmatprep.mubr.f32.mxu0 0.0
    %240 = vmatmul.mubr.f32.gmra.mrb[0].mxu0 %v162
    %v241 = vpop.f32.mrb[0].mxu0
    %v242 = vadd.f32 %v145, %v241
    %v243 = vpop.f32.mrb[0].mxu0
    %244 = vmatprep.mubr.f32.mxu0 0.0
    %245 = vmatmul.mubr.f32.gmra.mrb[0].mxu0 %v165
    %v246 = vpop.f32.mrb[0].mxu0
    %v247 = vadd.f32 %v150, %v246
    %v248 = vpop.f32.mrb[0].mxu0
    %249 = vmatprep.mubr.f32.mxu0 0.0
    %250 = vmatmul.mubr.f32.gmra.mrb[0].mxu0 %v168
    %v251 = vpop.f32.mrb[0].mxu0
    %v252 = vadd.f32 %v155, %v251
    %v253 = vpop.f32.mrb[0].mxu0
    %254 = vdwg.mxu0
    %v255 = vld [vmem:[#allocation5 + $0x60] sm:$0xff]
    %v256 = vld [vmem:[#allocation5 + $0x68] sm:$0xff]
    %v258 = vsel %vm60, %v44, 0
    %v261 = vsel %vm60, %v45, 0
    %v264 = vsel %vm60, %v52, 0
    %v267 = vsel %vm60, %v53, 0
    %269 = vmatprep.subr.mxu0 0.0
    %270 = vmatpush1.msra.mxu0 %v255
    %271 = vmatprep.subr.mxu0 0.0
    %272 = vmatpush1.msra.mxu0 %v256
    %273 = vmatprep.subr.mxu0 0.0
    %274 = vmatpush1.msra.mxu0 0.0
    %275 = vmatprep.subr.mxu0 0.0
    %276 = vmatpush1.msra.mxu0 0.0
    %277 = vmatprep.subr.mxu0 0.0
    %278 = vmatpush1.msra.mxu0 0.0
    %279 = vmatprep.subr.mxu0 0.0
    %280 = vmatpush1.msra.mxu0 0.0
    %281 = vmatprep.subr.mxu0 0.0
    %282 = vmatpush1.msra.mxu0 0.0
    %283 = vmatprep.subr.mxu0 0.0
    %284 = vmatpush1.msra.mxu0 0.0
    %285 = vmatprep.subr.mxu0 0.0
    %286 = vmatpush1.msra.mxu0 0.0
    %287 = vmatprep.subr.mxu0 0.0
    %288 = vmatpush1.msra.mxu0 0.0
    %289 = vmatprep.subr.mxu0 0.0
    %290 = vmatpush1.msra.mxu0 0.0
    %291 = vmatprep.subr.mxu0 0.0
    %292 = vmatpush1.msra.mxu0 0.0
    %293 = vmatprep.subr.mxu0 0.0
    %294 = vmatpush1.msra.mxu0 0.0
    %295 = vmatprep.subr.mxu0 0.0
    %296 = vmatpush1.msra.mxu0 0.0
    %297 = vmatprep.subr.mxu0 0.0
    %298 = vmatpush1.msra.mxu0 0.0
    %299 = vmatprep.subr.mxu0 0.0
    %300 = vmatpush1.msra.mxu0 0.0
    %301 = vmatprep.subr.mxu0 0.0
    %302 = vmatpush1.msra.mxu0 0.0
    %303 = vmatprep.subr.mxu0 0.0
    %304 = vmatpush1.msra.mxu0 0.0
    %305 = vmatprep.subr.mxu0 0.0
    %306 = vmatpush1.msra.mxu0 0.0
    %307 = vmatprep.subr.mxu0 0.0
    %308 = vmatpush1.msra.mxu0 0.0
    %309 = vmatprep.subr.mxu0 0.0
    %310 = vmatpush1.msra.mxu0 0.0
    %311 = vmatprep.subr.mxu0 0.0
    %312 = vmatpush1.msra.mxu0 0.0
    %313 = vmatprep.subr.mxu0 0.0
    %314 = vmatpush1.msra.mxu0 0.0
    %315 = vmatprep.subr.mxu0 0.0
    %316 = vmatpush1.msra.mxu0 0.0
    %317 = vmatprep.subr.mxu0 0.0
    %318 = vmatpush1.msra.mxu0 0.0
    %319 = vmatprep.subr.mxu0 0.0
    %320 = vmatpush1.msra.mxu0 0.0
    %321 = vmatprep.subr.mxu0 0.0
    %322 = vmatpush1.msra.mxu0 0.0
    %323 = vmatprep.subr.mxu0 0.0
    %324 = vmatpush1.msra.mxu0 0.0
    %325 = vmatprep.subr.mxu0 0.0
    %326 = vmatpush1.msra.mxu0 0.0
    %327 = vmatprep.subr.mxu0 0.0
    %328 = vmatpush1.msra.mxu0 0.0
    %329 = vmatprep.subr.mxu0 0.0
    %330 = vmatpush1.msra.mxu0 0.0
    %331 = vmatprep.subr.mxu0 0.0
    %332 = vmatpush1.msra.mxu0 0.0
    %333 = vmatprep.mubr.f32.mxu0 0.0
    %334 = vmatmul.mubr.f32.gmra.mrb[0].mxu0 %v258
    %v335 = vpop.f32.mrb[0].mxu0
    %v336 = vadd.f32 0.0, %v335
    %v337 = vpop.f32.mrb[0].mxu0
    %338 = vmatprep.mubr.f32.mxu0 0.0
    %339 = vmatmul.mubr.f32.gmra.mrb[0].mxu0 %v261
    %v340 = vpop.f32.mrb[0].mxu0
    %v341 = vadd.f32 0.0, %v340
    %v342 = vpop.f32.mrb[0].mxu0
    %343 = vmatprep.mubr.f32.mxu0 0.0
    %344 = vmatmul.mubr.f32.gmra.mrb[0].mxu0 %v264
    %v345 = vpop.f32.mrb[0].mxu0
    %v346 = vadd.f32 0.0, %v345
    %v347 = vpop.f32.mrb[0].mxu0
    %348 = vmatprep.mubr.f32.mxu0 0.0
    %349 = vmatmul.mubr.f32.gmra.mrb[0].mxu0 %v267
    %v350 = vpop.f32.mrb[0].mxu0
    %v351 = vadd.f32 0.0, %v350
    %v352 = vpop.f32.mrb[0].mxu0
    %353 = vdwg.mxu0
    %v354 = vadd.f32 %v237, %v336
    %v355 = vadd.f32 %v242, %v341
    %v356 = vadd.f32 %v247, %v346
    %v357 = vadd.f32 %v252, %v351
    %v358 = vld [vmem:[#allocation5 + $0x90] sm:$0xff]
    %v359 = vld [vmem:[#allocation5 + $0x98] sm:$0xff]
    %v361 = vsel %vm60, %v46, 0
    %v364 = vsel %vm60, %v47, 0
    %v367 = vsel %vm60, %v54, 0
    %v370 = vsel %vm60, %v55, 0
    %372 = vmatprep.subr.mxu0 0.0
    %373 = vmatpush1.msra.mxu0 %v358
    %374 = vmatprep.subr.mxu0 0.0
    %375 = vmatpush1.msra.mxu0 %v359
    %376 = vmatprep.subr.mxu0 0.0
    %377 = vmatpush1.msra.mxu0 0.0
    %378 = vmatprep.subr.mxu0 0.0
    %379 = vmatpush1.msra.mxu0 0.0
    %380 = vmatprep.subr.mxu0 0.0
    %381 = vmatpush1.msra.mxu0 0.0
    %382 = vmatprep.subr.mxu0 0.0
    %383 = vmatpush1.msra.mxu0 0.0
    %384 = vmatprep.subr.mxu0 0.0
    %385 = vmatpush1.msra.mxu0 0.0
    %386 = vmatprep.subr.mxu0 0.0
    %387 = vmatpush1.msra.mxu0 0.0
    %388 = vmatprep.subr.mxu0 0.0
    %389 = vmatpush1.msra.mxu0 0.0
    %390 = vmatprep.subr.mxu0 0.0
    %391 = vmatpush1.msra.mxu0 0.0
    %392 = vmatprep.subr.mxu0 0.0
    %393 = vmatpush1.msra.mxu0 0.0
    %394 = vmatprep.subr.mxu0 0.0
    %395 = vmatpush1.msra.mxu0 0.0
    %396 = vmatprep.subr.mxu0 0.0
    %397 = vmatpush1.msra.mxu0 0.0
    %398 = vmatprep.subr.mxu0 0.0
    %399 = vmatpush1.msra.mxu0 0.0
    %400 = vmatprep.subr.mxu0 0.0
    %401 = vmatpush1.msra.mxu0 0.0
    %402 = vmatprep.subr.mxu0 0.0
    %403 = vmatpush1.msra.mxu0 0.0
    %404 = vmatprep.subr.mxu0 0.0
    %405 = vmatpush1.msra.mxu0 0.0
    %406 = vmatprep.subr.mxu0 0.0
    %407 = vmatpush1.msra.mxu0 0.0
    %408 = vmatprep.subr.mxu0 0.0
    %409 = vmatpush1.msra.mxu0 0.0
    %410 = vmatprep.subr.mxu0 0.0
    %411 = vmatpush1.msra.mxu0 0.0
    %412 = vmatprep.subr.mxu0 0.0
    %413 = vmatpush1.msra.mxu0 0.0
    %414 = vmatprep.subr.mxu0 0.0
    %415 = vmatpush1.msra.mxu0 0.0
    %416 = vmatprep.subr.mxu0 0.0
    %417 = vmatpush1.msra.mxu0 0.0
    %418 = vmatprep.subr.mxu0 0.0
    %419 = vmatpush1.msra.mxu0 0.0
    %420 = vmatprep.subr.mxu0 0.0
    %421 = vmatpush1.msra.mxu0 0.0
    %422 = vmatprep.subr.mxu0 0.0
    %423 = vmatpush1.msra.mxu0 0.0
    %424 = vmatprep.subr.mxu0 0.0
    %425 = vmatpush1.msra.mxu0 0.0
    %426 = vmatprep.subr.mxu0 0.0
    %427 = vmatpush1.msra.mxu0 0.0
    %428 = vmatprep.subr.mxu0 0.0
    %429 = vmatpush1.msra.mxu0 0.0
    %430 = vmatprep.subr.mxu0 0.0
    %431 = vmatpush1.msra.mxu0 0.0
    %432 = vmatprep.subr.mxu0 0.0
    %433 = vmatpush1.msra.mxu0 0.0
    %434 = vmatprep.subr.mxu0 0.0
    %435 = vmatpush1.msra.mxu0 0.0
    %436 = vmatprep.mubr.f32.mxu0 0.0
    %437 = vmatmul.mubr.f32.gmra.mrb[0].mxu0 %v361
    %v438 = vpop.f32.mrb[0].mxu0
    %v439 = vadd.f32 0.0, %v438
    %v440 = vpop.f32.mrb[0].mxu0
    %441 = vmatprep.mubr.f32.mxu0 0.0
    %442 = vmatmul.mubr.f32.gmra.mrb[0].mxu0 %v364
    %v443 = vpop.f32.mrb[0].mxu0
    %v444 = vadd.f32 0.0, %v443
    %v445 = vpop.f32.mrb[0].mxu0
    %446 = vmatprep.mubr.f32.mxu0 0.0
    %447 = vmatmul.mubr.f32.gmra.mrb[0].mxu0 %v367
    %v448 = vpop.f32.mrb[0].mxu0
    %v449 = vadd.f32 0.0, %v448
    %v450 = vpop.f32.mrb[0].mxu0
    %451 = vmatprep.mubr.f32.mxu0 0.0
    %452 = vmatmul.mubr.f32.gmra.mrb[0].mxu0 %v370
    %v453 = vpop.f32.mrb[0].mxu0
    %v454 = vadd.f32 0.0, %v453
    %v455 = vpop.f32.mrb[0].mxu0
    %456 = vdwg.mxu0
    %v457 = vadd.f32 %v354, %v439
    %v458 = vadd.f32 %v355, %v444
    %v459 = vadd.f32 %v356, %v449
    %v460 = vadd.f32 %v357, %v454
    %vm461 = vcmask 1046528
    %v462 = vrot.slane %v40, 1
    %v463 = vrot.slane %v41, 1
    %v464 = vsel %vm461, %v462, %v463
    %v465 = vrot.slane %v42, 1
    %v466 = vrot.slane %v43, 1
    %v467 = vsel %vm461, %v465, %v466
    %v468 = vrot.slane %v44, 1
    %v469 = vrot.slane %v45, 1
    %v470 = vsel %vm461, %v468, %v469
    %v471 = vrot.slane %v46, 1
    %v472 = vrot.slane %v47, 1
    %v473 = vsel %vm461, %v471, %v472
    %v474 = vrot.slane %v48, 1
    %v475 = vrot.slane %v49, 1
    %v476 = vsel %vm461, %v474, %v475
    %v477 = vrot.slane %v50, 1
    %v478 = vrot.slane %v51, 1
    %v479 = vsel %vm461, %v477, %v478
    %v480 = vrot.slane %v52, 1
    %v481 = vrot.slane %v53, 1
    %v482 = vsel %vm461, %v480, %v481
    %v483 = vrot.slane %v54, 1
    %v484 = vrot.slane %v55, 1
    %v485 = vsel %vm461, %v483, %v484
    %v502 = vsel %vm461, %v463, %v462
    %v503 = vsel %vm461, %v466, %v465
    %v504 = vsel %vm461, %v469, %v468
    %v505 = vsel %vm461, %v472, %v471
    %v506 = vsel %vm461, %v475, %v474
    %v507 = vsel %vm461, %v478, %v477
    %v508 = vsel %vm461, %v481, %v480
    %v509 = vsel %vm461, %v484, %v483
    %v510 = vld [vmem:[#allocation5 + $0x10] sm:$0xff]
    %v511 = vld [vmem:[#allocation5 + $0x18] sm:$0xff]
    %v512 = vsel %vm60, %v464, 0
    %v515 = vsel %vm60, %v502, 0
    %v517 = vsel %vm60, %v476, 0
    %v520 = vsel %vm60, %v506, 0
    %522 = vmatprep.subr.mxu0 0.0
    %523 = vmatpush1.msra.mxu0 %v510
    %524 = vmatprep.subr.mxu0 0.0
    %525 = vmatpush1.msra.mxu0 %v511
    %526 = vmatprep.subr.mxu0 0.0
    %527 = vmatpush1.msra.mxu0 0.0
    %528 = vmatprep.subr.mxu0 0.0
    %529 = vmatpush1.msra.mxu0 0.0
    %530 = vmatprep.subr.mxu0 0.0
    %531 = vmatpush1.msra.mxu0 0.0
    %532 = vmatprep.subr.mxu0 0.0
    %533 = vmatpush1.msra.mxu0 0.0
    %534 = vmatprep.subr.mxu0 0.0
    %535 = vmatpush1.msra.mxu0 0.0
    %536 = vmatprep.subr.mxu0 0.0
    %537 = vmatpush1.msra.mxu0 0.0
    %538 = vmatprep.subr.mxu0 0.0
    %539 = vmatpush1.msra.mxu0 0.0
    %540 = vmatprep.subr.mxu0 0.0
    %541 = vmatpush1.msra.mxu0 0.0
    %542 = vmatprep.subr.mxu0 0.0
    %543 = vmatpush1.msra.mxu0 0.0
    %544 = vmatprep.subr.mxu0 0.0
    %545 = vmatpush1.msra.mxu0 0.0
    %546 = vmatprep.subr.mxu0 0.0
    %547 = vmatpush1.msra.mxu0 0.0
    %548 = vmatprep.subr.mxu0 0.0
    %549 = vmatpush1.msra.mxu0 0.0
    %550 = vmatprep.subr.mxu0 0.0
    %551 = vmatpush1.msra.mxu0 0.0
    %552 = vmatprep.subr.mxu0 0.0
    %553 = vmatpush1.msra.mxu0 0.0
    %554 = vmatprep.subr.mxu0 0.0
    %555 = vmatpush1.msra.mxu0 0.0
    %556 = vmatprep.subr.mxu0 0.0
    %557 = vmatpush1.msra.mxu0 0.0
    %558 = vmatprep.subr.mxu0 0.0
    %559 = vmatpush1.msra.mxu0 0.0
    %560 = vmatprep.subr.mxu0 0.0
    %561 = vmatpush1.msra.mxu0 0.0
    %562 = vmatprep.subr.mxu0 0.0
    %563 = vmatpush1.msra.mxu0 0.0
    %564 = vmatprep.subr.mxu0 0.0
    %565 = vmatpush1.msra.mxu0 0.0
    %566 = vmatprep.subr.mxu0 0.0
    %567 = vmatpush1.msra.mxu0 0.0
    %568 = vmatprep.subr.mxu0 0.0
    %569 = vmatpush1.msra.mxu0 0.0
    %570 = vmatprep.subr.mxu0 0.0
    %571 = vmatpush1.msra.mxu0 0.0
    %572 = vmatprep.subr.mxu0 0.0
    %573 = vmatpush1.msra.mxu0 0.0
    %574 = vmatprep.subr.mxu0 0.0
    %575 = vmatpush1.msra.mxu0 0.0
    %576 = vmatprep.subr.mxu0 0.0
    %577 = vmatpush1.msra.mxu0 0.0
    %578 = vmatprep.subr.mxu0 0.0
    %579 = vmatpush1.msra.mxu0 0.0
    %580 = vmatprep.subr.mxu0 0.0
    %581 = vmatpush1.msra.mxu0 0.0
    %582 = vmatprep.subr.mxu0 0.0
    %583 = vmatpush1.msra.mxu0 0.0
    %584 = vmatprep.subr.mxu0 0.0
    %585 = vmatpush1.msra.mxu0 0.0
    %586 = vmatprep.mubr.f32.mxu0 0.0
    %587 = vmatmul.mubr.f32.gmra.mrb[0].mxu0 %v512
    %v588 = vpop.f32.mrb[0].mxu0
    %v589 = vadd.f32 0.0, %v588
    %v590 = vpop.f32.mrb[0].mxu0
    %591 = vmatprep.mubr.f32.mxu0 0.0
    %592 = vmatmul.mubr.f32.gmra.mrb[0].mxu0 %v515
    %v593 = vpop.f32.mrb[0].mxu0
    %v594 = vadd.f32 0.0, %v593
    %v595 = vpop.f32.mrb[0].mxu0
    %596 = vmatprep.mubr.f32.mxu0 0.0
    %597 = vmatmul.mubr.f32.gmra.mrb[0].mxu0 %v517
    %v598 = vpop.f32.mrb[0].mxu0
    %v599 = vadd.f32 0.0, %v598
    %v600 = vpop.f32.mrb[0].mxu0
    %601 = vmatprep.mubr.f32.mxu0 0.0
    %602 = vmatmul.mubr.f32.gmra.mrb[0].mxu0 %v520
    %v603 = vpop.f32.mrb[0].mxu0
    %v604 = vadd.f32 0.0, %v603
    %v605 = vpop.f32.mrb[0].mxu0
    %606 = vdwg.mxu0
    %v607 = vadd.f32 %v457, %v589
    %v608 = vadd.f32 %v458, %v594
    %v609 = vadd.f32 %v459, %v599
    %v610 = vadd.f32 %v460, %v604
    %v611 = vld [vmem:[#allocation5 + $0x40] sm:$0xff]
    %v612 = vld [vmem:[#allocation5 + $0x48] sm:$0xff]
    %v613 = vsel %vm60, %v467, 0
    %v616 = vsel %vm60, %v503, 0
    %v618 = vsel %vm60, %v479, 0
    %v621 = vsel %vm60, %v507, 0
    %623 = vmatprep.subr.mxu0 0.0
    %624 = vmatpush1.msra.mxu0 %v611
    %625 = vmatprep.subr.mxu0 0.0
    %626 = vmatpush1.msra.mxu0 %v612
    %627 = vmatprep.subr.mxu0 0.0
    %628 = vmatpush1.msra.mxu0 0.0
    %629 = vmatprep.subr.mxu0 0.0
    %630 = vmatpush1.msra.mxu0 0.0
    %631 = vmatprep.subr.mxu0 0.0
    %632 = vmatpush1.msra.mxu0 0.0
    %633 = vmatprep.subr.mxu0 0.0
    %634 = vmatpush1.msra.mxu0 0.0
    %635 = vmatprep.subr.mxu0 0.0
    %636 = vmatpush1.msra.mxu0 0.0
    %637 = vmatprep.subr.mxu0 0.0
    %638 = vmatpush1.msra.mxu0 0.0
    %639 = vmatprep.subr.mxu0 0.0
    %640 = vmatpush1.msra.mxu0 0.0
    %641 = vmatprep.subr.mxu0 0.0
    %642 = vmatpush1.msra.mxu0 0.0
    %643 = vmatprep.subr.mxu0 0.0
    %644 = vmatpush1.msra.mxu0 0.0
    %645 = vmatprep.subr.mxu0 0.0
    %646 = vmatpush1.msra.mxu0 0.0
    %647 = vmatprep.subr.mxu0 0.0
    %648 = vmatpush1.msra.mxu0 0.0
    %649 = vmatprep.subr.mxu0 0.0
    %650 = vmatpush1.msra.mxu0 0.0
    %651 = vmatprep.subr.mxu0 0.0
    %652 = vmatpush1.msra.mxu0 0.0
    %653 = vmatprep.subr.mxu0 0.0
    %654 = vmatpush1.msra.mxu0 0.0
    %655 = vmatprep.subr.mxu0 0.0
    %656 = vmatpush1.msra.mxu0 0.0
    %657 = vmatprep.subr.mxu0 0.0
    %658 = vmatpush1.msra.mxu0 0.0
    %659 = vmatprep.subr.mxu0 0.0
    %660 = vmatpush1.msra.mxu0 0.0
    %661 = vmatprep.subr.mxu0 0.0
    %662 = vmatpush1.msra.mxu0 0.0
    %663 = vmatprep.subr.mxu0 0.0
    %664 = vmatpush1.msra.mxu0 0.0
    %665 = vmatprep.subr.mxu0 0.0
    %666 = vmatpush1.msra.mxu0 0.0
    %667 = vmatprep.subr.mxu0 0.0
    %668 = vmatpush1.msra.mxu0 0.0
    %669 = vmatprep.subr.mxu0 0.0
    %670 = vmatpush1.msra.mxu0 0.0
    %671 = vmatprep.subr.mxu0 0.0
    %672 = vmatpush1.msra.mxu0 0.0
    %673 = vmatprep.subr.mxu0 0.0
    %674 = vmatpush1.msra.mxu0 0.0
    %675 = vmatprep.subr.mxu0 0.0
    %676 = vmatpush1.msra.mxu0 0.0
    %677 = vmatprep.subr.mxu0 0.0
    %678 = vmatpush1.msra.mxu0 0.0
    %679 = vmatprep.subr.mxu0 0.0
    %680 = vmatpush1.msra.mxu0 0.0
    %681 = vmatprep.subr.mxu0 0.0
    %682 = vmatpush1.msra.mxu0 0.0
    %683 = vmatprep.subr.mxu0 0.0
    %684 = vmatpush1.msra.mxu0 0.0
    %685 = vmatprep.subr.mxu0 0.0
    %686 = vmatpush1.msra.mxu0 0.0
    %687 = vmatprep.mubr.f32.mxu0 0.0
    %688 = vmatmul.mubr.f32.gmra.mrb[0].mxu0 %v613
    %v689 = vpop.f32.mrb[0].mxu0
    %v690 = vadd.f32 0.0, %v689
    %v691 = vpop.f32.mrb[0].mxu0
    %692 = vmatprep.mubr.f32.mxu0 0.0
    %693 = vmatmul.mubr.f32.gmra.mrb[0].mxu0 %v616
    %v694 = vpop.f32.mrb[0].mxu0
    %v695 = vadd.f32 0.0, %v694
    %v696 = vpop.f32.mrb[0].mxu0
    %697 = vmatprep.mubr.f32.mxu0 0.0
    %698 = vmatmul.mubr.f32.gmra.mrb[0].mxu0 %v618
    %v699 = vpop.f32.mrb[0].mxu0
    %v700 = vadd.f32 0.0, %v699
    %v701 = vpop.f32.mrb[0].mxu0
    %702 = vmatprep.mubr.f32.mxu0 0.0
    %703 = vmatmul.mubr.f32.gmra.mrb[0].mxu0 %v621
    %v704 = vpop.f32.mrb[0].mxu0
    %v705 = vadd.f32 0.0, %v704
    %v706 = vpop.f32.mrb[0].mxu0
    %707 = vdwg.mxu0
    %v708 = vadd.f32 %v607, %v690
    %v709 = vadd.f32 %v608, %v695
    %v710 = vadd.f32 %v609, %v700
    %v711 = vadd.f32 %v610, %v705
    %v712 = vld [vmem:[#allocation5 + $0x70] sm:$0xff]
    %v713 = vld [vmem:[#allocation5 + $0x78] sm:$0xff]
    %v714 = vsel %vm60, %v470, 0
    %v717 = vsel %vm60, %v504, 0
    %v719 = vsel %vm60, %v482, 0
    %v722 = vsel %vm60, %v508, 0
    %724 = vmatprep.subr.mxu0 0.0
    %725 = vmatpush1.msra.mxu0 %v712
    %726 = vmatprep.subr.mxu0 0.0
    %727 = vmatpush1.msra.mxu0 %v713
    %728 = vmatprep.subr.mxu0 0.0
    %729 = vmatpush1.msra.mxu0 0.0
    %730 = vmatprep.subr.mxu0 0.0
    %731 = vmatpush1.msra.mxu0 0.0
    %732 = vmatprep.subr.mxu0 0.0
    %733 = vmatpush1.msra.mxu0 0.0
    %734 = vmatprep.subr.mxu0 0.0
    %735 = vmatpush1.msra.mxu0 0.0
    %736 = vmatprep.subr.mxu0 0.0
    %737 = vmatpush1.msra.mxu0 0.0
    %738 = vmatprep.subr.mxu0 0.0
    %739 = vmatpush1.msra.mxu0 0.0
    %740 = vmatprep.subr.mxu0 0.0
    %741 = vmatpush1.msra.mxu0 0.0
    %742 = vmatprep.subr.mxu0 0.0
    %743 = vmatpush1.msra.mxu0 0.0
    %744 = vmatprep.subr.mxu0 0.0
    %745 = vmatpush1.msra.mxu0 0.0
    %746 = vmatprep.subr.mxu0 0.0
    %747 = vmatpush1.msra.mxu0 0.0
    %748 = vmatprep.subr.mxu0 0.0
    %749 = vmatpush1.msra.mxu0 0.0
    %750 = vmatprep.subr.mxu0 0.0
    %751 = vmatpush1.msra.mxu0 0.0
    %752 = vmatprep.subr.mxu0 0.0
    %753 = vmatpush1.msra.mxu0 0.0
    %754 = vmatprep.subr.mxu0 0.0
    %755 = vmatpush1.msra.mxu0 0.0
    %756 = vmatprep.subr.mxu0 0.0
    %757 = vmatpush1.msra.mxu0 0.0
    %758 = vmatprep.subr.mxu0 0.0
    %759 = vmatpush1.msra.mxu0 0.0
    %760 = vmatprep.subr.mxu0 0.0
    %761 = vmatpush1.msra.mxu0 0.0
    %762 = vmatprep.subr.mxu0 0.0
    %763 = vmatpush1.msra.mxu0 0.0
    %764 = vmatprep.subr.mxu0 0.0
    %765 = vmatpush1.msra.mxu0 0.0
    %766 = vmatprep.subr.mxu0 0.0
    %767 = vmatpush1.msra.mxu0 0.0
    %768 = vmatprep.subr.mxu0 0.0
    %769 = vmatpush1.msra.mxu0 0.0
    %770 = vmatprep.subr.mxu0 0.0
    %771 = vmatpush1.msra.mxu0 0.0
    %772 = vmatprep.subr.mxu0 0.0
    %773 = vmatpush1.msra.mxu0 0.0
    %774 = vmatprep.subr.mxu0 0.0
    %775 = vmatpush1.msra.mxu0 0.0
    %776 = vmatprep.subr.mxu0 0.0
    %777 = vmatpush1.msra.mxu0 0.0
    %778 = vmatprep.subr.mxu0 0.0
    %779 = vmatpush1.msra.mxu0 0.0
    %780 = vmatprep.subr.mxu0 0.0
    %781 = vmatpush1.msra.mxu0 0.0
    %782 = vmatprep.subr.mxu0 0.0
    %783 = vmatpush1.msra.mxu0 0.0
    %784 = vmatprep.subr.mxu0 0.0
    %785 = vmatpush1.msra.mxu0 0.0
    %786 = vmatprep.subr.mxu0 0.0
    %787 = vmatpush1.msra.mxu0 0.0
    %788 = vmatprep.mubr.f32.mxu0 0.0
    %789 = vmatmul.mubr.f32.gmra.mrb[0].mxu0 %v714
    %v790 = vpop.f32.mrb[0].mxu0
    %v791 = vadd.f32 0.0, %v790
    %v792 = vpop.f32.mrb[0].mxu0
    %793 = vmatprep.mubr.f32.mxu0 0.0
    %794 = vmatmul.mubr.f32.gmra.mrb[0].mxu0 %v717
    %v795 = vpop.f32.mrb[0].mxu0
    %v796 = vadd.f32 0.0, %v795
    %v797 = vpop.f32.mrb[0].mxu0
    %798 = vmatprep.mubr.f32.mxu0 0.0
    %799 = vmatmul.mubr.f32.gmra.mrb[0].mxu0 %v719
    %v800 = vpop.f32.mrb[0].mxu0
    %v801 = vadd.f32 0.0, %v800
    %v802 = vpop.f32.mrb[0].mxu0
    %803 = vmatprep.mubr.f32.mxu0 0.0
    %804 = vmatmul.mubr.f32.gmra.mrb[0].mxu0 %v722
    %v805 = vpop.f32.mrb[0].mxu0
    %v806 = vadd.f32 0.0, %v805
    %v807 = vpop.f32.mrb[0].mxu0
    %808 = vdwg.mxu0
    %v809 = vadd.f32 %v708, %v791
    %v810 = vadd.f32 %v709, %v796
    %v811 = vadd.f32 %v710, %v801
    %v812 = vadd.f32 %v711, %v806
    %v813 = vld [vmem:[#allocation5 + $0xa0] sm:$0xff]
    %v814 = vld [vmem:[#allocation5 + $0xa8] sm:$0xff]
    %v815 = vsel %vm60, %v473, 0
    %v818 = vsel %vm60, %v505, 0
    %v820 = vsel %vm60, %v485, 0
    %v823 = vsel %vm60, %v509, 0
    %825 = vmatprep.subr.mxu0 0.0
    %826 = vmatpush1.msra.mxu0 %v813
    %827 = vmatprep.subr.mxu0 0.0
    %828 = vmatpush1.msra.mxu0 %v814
    %829 = vmatprep.subr.mxu0 0.0
    %830 = vmatpush1.msra.mxu0 0.0
    %831 = vmatprep.subr.mxu0 0.0
    %832 = vmatpush1.msra.mxu0 0.0
    %833 = vmatprep.subr.mxu0 0.0
    %834 = vmatpush1.msra.mxu0 0.0
    %835 = vmatprep.subr.mxu0 0.0
    %836 = vmatpush1.msra.mxu0 0.0
    %837 = vmatprep.subr.mxu0 0.0
    %838 = vmatpush1.msra.mxu0 0.0
    %839 = vmatprep.subr.mxu0 0.0
    %840 = vmatpush1.msra.mxu0 0.0
    %841 = vmatprep.subr.mxu0 0.0
    %842 = vmatpush1.msra.mxu0 0.0
    %843 = vmatprep.subr.mxu0 0.0
    %844 = vmatpush1.msra.mxu0 0.0
    %845 = vmatprep.subr.mxu0 0.0
    %846 = vmatpush1.msra.mxu0 0.0
    %847 = vmatprep.subr.mxu0 0.0
    %848 = vmatpush1.msra.mxu0 0.0
    %849 = vmatprep.subr.mxu0 0.0
    %850 = vmatpush1.msra.mxu0 0.0
    %851 = vmatprep.subr.mxu0 0.0
    %852 = vmatpush1.msra.mxu0 0.0
    %853 = vmatprep.subr.mxu0 0.0
    %854 = vmatpush1.msra.mxu0 0.0
    %855 = vmatprep.subr.mxu0 0.0
    %856 = vmatpush1.msra.mxu0 0.0
    %857 = vmatprep.subr.mxu0 0.0
    %858 = vmatpush1.msra.mxu0 0.0
    %859 = vmatprep.subr.mxu0 0.0
    %860 = vmatpush1.msra.mxu0 0.0
    %861 = vmatprep.subr.mxu0 0.0
    %862 = vmatpush1.msra.mxu0 0.0
    %863 = vmatprep.subr.mxu0 0.0
    %864 = vmatpush1.msra.mxu0 0.0
    %865 = vmatprep.subr.mxu0 0.0
    %866 = vmatpush1.msra.mxu0 0.0
    %867 = vmatprep.subr.mxu0 0.0
    %868 = vmatpush1.msra.mxu0 0.0
    %869 = vmatprep.subr.mxu0 0.0
    %870 = vmatpush1.msra.mxu0 0.0
    %871 = vmatprep.subr.mxu0 0.0
    %872 = vmatpush1.msra.mxu0 0.0
    %873 = vmatprep.subr.mxu0 0.0
    %874 = vmatpush1.msra.mxu0 0.0
    %875 = vmatprep.subr.mxu0 0.0
    %876 = vmatpush1.msra.mxu0 0.0
    %877 = vmatprep.subr.mxu0 0.0
    %878 = vmatpush1.msra.mxu0 0.0
    %879 = vmatprep.subr.mxu0 0.0
    %880 = vmatpush1.msra.mxu0 0.0
    %881 = vmatprep.subr.mxu0 0.0
    %882 = vmatpush1.msra.mxu0 0.0
    %883 = vmatprep.subr.mxu0 0.0
    %884 = vmatpush1.msra.mxu0 0.0
    %885 = vmatprep.subr.mxu0 0.0
    %886 = vmatpush1.msra.mxu0 0.0
    %887 = vmatprep.subr.mxu0 0.0
    %888 = vmatpush1.msra.mxu0 0.0
    %889 = vmatprep.mubr.f32.mxu0 0.0
    %890 = vmatmul.mubr.f32.gmra.mrb[0].mxu0 %v815
    %v891 = vpop.f32.mrb[0].mxu0
    %v892 = vadd.f32 0.0, %v891
    %v893 = vpop.f32.mrb[0].mxu0
    %894 = vmatprep.mubr.f32.mxu0 0.0
    %895 = vmatmul.mubr.f32.gmra.mrb[0].mxu0 %v818
    %v896 = vpop.f32.mrb[0].mxu0
    %v897 = vadd.f32 0.0, %v896
    %v898 = vpop.f32.mrb[0].mxu0
    %899 = vmatprep.mubr.f32.mxu0 0.0
    %900 = vmatmul.mubr.f32.gmra.mrb[0].mxu0 %v820
    %v901 = vpop.f32.mrb[0].mxu0
    %v902 = vadd.f32 0.0, %v901
    %v903 = vpop.f32.mrb[0].mxu0
    %904 = vmatprep.mubr.f32.mxu0 0.0
    %905 = vmatmul.mubr.f32.gmra.mrb[0].mxu0 %v823
    %v906 = vpop.f32.mrb[0].mxu0
    %v907 = vadd.f32 0.0, %v906
    %v908 = vpop.f32.mrb[0].mxu0
    %909 = vdwg.mxu0
    %v910 = vadd.f32 %v809, %v892
    %v911 = vadd.f32 %v810, %v897
    %v912 = vadd.f32 %v811, %v902
    %v913 = vadd.f32 %v812, %v907
    %vm914 = vcmask 1045504
    %v915 = vrot.slane %v40, 2
    %v916 = vrot.slane %v41, 2
    %v917 = vsel %vm914, %v915, %v916
    %v918 = vrot.slane %v42, 2
    %v919 = vrot.slane %v43, 2
    %v920 = vsel %vm914, %v918, %v919
    %v921 = vrot.slane %v44, 2
    %v922 = vrot.slane %v45, 2
    %v923 = vsel %vm914, %v921, %v922
    %v924 = vrot.slane %v46, 2
    %v925 = vrot.slane %v47, 2
    %v926 = vsel %vm914, %v924, %v925
    %v927 = vrot.slane %v48, 2
    %v928 = vrot.slane %v49, 2
    %v929 = vsel %vm914, %v927, %v928
    %v930 = vrot.slane %v50, 2
    %v931 = vrot.slane %v51, 2
    %v932 = vsel %vm914, %v930, %v931
    %v933 = vrot.slane %v52, 2
    %v934 = vrot.slane %v53, 2
    %v935 = vsel %vm914, %v933, %v934
    %v936 = vrot.slane %v54, 2
    %v937 = vrot.slane %v55, 2
    %v938 = vsel %vm914, %v936, %v937
    %v955 = vsel %vm914, %v916, %v915
    %v956 = vsel %vm914, %v919, %v918
    %v957 = vsel %vm914, %v922, %v921
    %v958 = vsel %vm914, %v925, %v924
    %v959 = vsel %vm914, %v928, %v927
    %v960 = vsel %vm914, %v931, %v930
    %v961 = vsel %vm914, %v934, %v933
    %v962 = vsel %vm914, %v937, %v936
    %v963 = vld [vmem:[#allocation5 + $0x20] sm:$0xff]
    %v964 = vld [vmem:[#allocation5 + $0x28] sm:$0xff]
    %v965 = vsel %vm60, %v917, 0
    %v968 = vsel %vm60, %v955, 0
    %v970 = vsel %vm60, %v929, 0
    %v973 = vsel %vm60, %v959, 0
    %975 = vmatprep.subr.mxu0 0.0
    %976 = vmatpush1.msra.mxu0 %v963
    %977 = vmatprep.subr.mxu0 0.0
    %978 = vmatpush1.msra.mxu0 %v964
    %979 = vmatprep.subr.mxu0 0.0
    %980 = vmatpush1.msra.mxu0 0.0
    %981 = vmatprep.subr.mxu0 0.0
    %982 = vmatpush1.msra.mxu0 0.0
    %983 = vmatprep.subr.mxu0 0.0
    %984 = vmatpush1.msra.mxu0 0.0
    %985 = vmatprep.subr.mxu0 0.0
    %986 = vmatpush1.msra.mxu0 0.0
    %987 = vmatprep.subr.mxu0 0.0
    %988 = vmatpush1.msra.mxu0 0.0
    %989 = vmatprep.subr.mxu0 0.0
    %990 = vmatpush1.msra.mxu0 0.0
    %991 = vmatprep.subr.mxu0 0.0
    %992 = vmatpush1.msra.mxu0 0.0
    %993 = vmatprep.subr.mxu0 0.0
    %994 = vmatpush1.msra.mxu0 0.0
    %995 = vmatprep.subr.mxu0 0.0
    %996 = vmatpush1.msra.mxu0 0.0
    %997 = vmatprep.subr.mxu0 0.0
    %998 = vmatpush1.msra.mxu0 0.0
    %999 = vmatprep.subr.mxu0 0.0
    %1000 = vmatpush1.msra.mxu0 0.0
    %1001 = vmatprep.subr.mxu0 0.0
    %1002 = vmatpush1.msra.mxu0 0.0
    %1003 = vmatprep.subr.mxu0 0.0
    %1004 = vmatpush1.msra.mxu0 0.0
    %1005 = vmatprep.subr.mxu0 0.0
    %1006 = vmatpush1.msra.mxu0 0.0
    %1007 = vmatprep.subr.mxu0 0.0
    %1008 = vmatpush1.msra.mxu0 0.0
    %1009 = vmatprep.subr.mxu0 0.0
    %1010 = vmatpush1.msra.mxu0 0.0
    %1011 = vmatprep.subr.mxu0 0.0
    %1012 = vmatpush1.msra.mxu0 0.0
    %1013 = vmatprep.subr.mxu0 0.0
    %1014 = vmatpush1.msra.mxu0 0.0
    %1015 = vmatprep.subr.mxu0 0.0
    %1016 = vmatpush1.msra.mxu0 0.0
    %1017 = vmatprep.subr.mxu0 0.0
    %1018 = vmatpush1.msra.mxu0 0.0
    %1019 = vmatprep.subr.mxu0 0.0
    %1020 = vmatpush1.msra.mxu0 0.0
    %1021 = vmatprep.subr.mxu0 0.0
    %1022 = vmatpush1.msra.mxu0 0.0
    %1023 = vmatprep.subr.mxu0 0.0
    %1024 = vmatpush1.msra.mxu0 0.0
    %1025 = vmatprep.subr.mxu0 0.0
    %1026 = vmatpush1.msra.mxu0 0.0
    %1027 = vmatprep.subr.mxu0 0.0
    %1028 = vmatpush1.msra.mxu0 0.0
    %1029 = vmatprep.subr.mxu0 0.0
    %1030 = vmatpush1.msra.mxu0 0.0
    %1031 = vmatprep.subr.mxu0 0.0
    %1032 = vmatpush1.msra.mxu0 0.0
    %1033 = vmatprep.subr.mxu0 0.0
    %1034 = vmatpush1.msra.mxu0 0.0
    %1035 = vmatprep.subr.mxu0 0.0
    %1036 = vmatpush1.msra.mxu0 0.0
    %1037 = vmatprep.subr.mxu0 0.0
    %1038 = vmatpush1.msra.mxu0 0.0
    %1039 = vmatprep.mubr.f32.mxu0 0.0
    %1040 = vmatmul.mubr.f32.gmra.mrb[0].mxu0 %v965
    %v1041 = vpop.f32.mrb[0].mxu0
    %v1042 = vadd.f32 0.0, %v1041
    %v1043 = vpop.f32.mrb[0].mxu0
    %1044 = vmatprep.mubr.f32.mxu0 0.0
    %1045 = vmatmul.mubr.f32.gmra.mrb[0].mxu0 %v968
    %v1046 = vpop.f32.mrb[0].mxu0
    %v1047 = vadd.f32 0.0, %v1046
    %v1048 = vpop.f32.mrb[0].mxu0
    %1049 = vmatprep.mubr.f32.mxu0 0.0
    %1050 = vmatmul.mubr.f32.gmra.mrb[0].mxu0 %v970
    %v1051 = vpop.f32.mrb[0].mxu0
    %v1052 = vadd.f32 0.0, %v1051
    %v1053 = vpop.f32.mrb[0].mxu0
    %1054 = vmatprep.mubr.f32.mxu0 0.0
    %1055 = vmatmul.mubr.f32.gmra.mrb[0].mxu0 %v973
    %v1056 = vpop.f32.mrb[0].mxu0
    %v1057 = vadd.f32 0.0, %v1056
    %v1058 = vpop.f32.mrb[0].mxu0
    %1059 = vdwg.mxu0
    %v1060 = vadd.f32 %v910, %v1042
    %v1061 = vadd.f32 %v911, %v1047
    %v1062 = vadd.f32 %v912, %v1052
    %v1063 = vadd.f32 %v913, %v1057
    %v1064 = vld [vmem:[#allocation5 + $0x50] sm:$0xff]
    %v1065 = vld [vmem:[#allocation5 + $0x58] sm:$0xff]
    %v1066 = vsel %vm60, %v920, 0
    %v1069 = vsel %vm60, %v956, 0
    %v1071 = vsel %vm60, %v932, 0
    %v1074 = vsel %vm60, %v960, 0
    %1076 = vmatprep.subr.mxu0 0.0
    %1077 = vmatpush1.msra.mxu0 %v1064
    %1078 = vmatprep.subr.mxu0 0.0
    %1079 = vmatpush1.msra.mxu0 %v1065
    %1080 = vmatprep.subr.mxu0 0.0
    %1081 = vmatpush1.msra.mxu0 0.0
    %1082 = vmatprep.subr.mxu0 0.0
    %1083 = vmatpush1.msra.mxu0 0.0
    %1084 = vmatprep.subr.mxu0 0.0
    %1085 = vmatpush1.msra.mxu0 0.0
    %1086 = vmatprep.subr.mxu0 0.0
    %1087 = vmatpush1.msra.mxu0 0.0
    %1088 = vmatprep.subr.mxu0 0.0
    %1089 = vmatpush1.msra.mxu0 0.0
    %1090 = vmatprep.subr.mxu0 0.0
    %1091 = vmatpush1.msra.mxu0 0.0
    %1092 = vmatprep.subr.mxu0 0.0
    %1093 = vmatpush1.msra.mxu0 0.0
    %1094 = vmatprep.subr.mxu0 0.0
    %1095 = vmatpush1.msra.mxu0 0.0
    %1096 = vmatprep.subr.mxu0 0.0
    %1097 = vmatpush1.msra.mxu0 0.0
    %1098 = vmatprep.subr.mxu0 0.0
    %1099 = vmatpush1.msra.mxu0 0.0
    %1100 = vmatprep.subr.mxu0 0.0
    %1101 = vmatpush1.msra.mxu0 0.0
    %1102 = vmatprep.subr.mxu0 0.0
    %1103 = vmatpush1.msra.mxu0 0.0
    %1104 = vmatprep.subr.mxu0 0.0
    %1105 = vmatpush1.msra.mxu0 0.0
    %1106 = vmatprep.subr.mxu0 0.0
    %1107 = vmatpush1.msra.mxu0 0.0
    %1108 = vmatprep.subr.mxu0 0.0
    %1109 = vmatpush1.msra.mxu0 0.0
    %1110 = vmatprep.subr.mxu0 0.0
    %1111 = vmatpush1.msra.mxu0 0.0
    %1112 = vmatprep.subr.mxu0 0.0
    %1113 = vmatpush1.msra.mxu0 0.0
    %1114 = vmatprep.subr.mxu0 0.0
    %1115 = vmatpush1.msra.mxu0 0.0
    %1116 = vmatprep.subr.mxu0 0.0
    %1117 = vmatpush1.msra.mxu0 0.0
    %1118 = vmatprep.subr.mxu0 0.0
    %1119 = vmatpush1.msra.mxu0 0.0
    %1120 = vmatprep.subr.mxu0 0.0
    %1121 = vmatpush1.msra.mxu0 0.0
    %1122 = vmatprep.subr.mxu0 0.0
    %1123 = vmatpush1.msra.mxu0 0.0
    %1124 = vmatprep.subr.mxu0 0.0
    %1125 = vmatpush1.msra.mxu0 0.0
    %1126 = vmatprep.subr.mxu0 0.0
    %1127 = vmatpush1.msra.mxu0 0.0
    %1128 = vmatprep.subr.mxu0 0.0
    %1129 = vmatpush1.msra.mxu0 0.0
    %1130 = vmatprep.subr.mxu0 0.0
    %1131 = vmatpush1.msra.mxu0 0.0
    %1132 = vmatprep.subr.mxu0 0.0
    %1133 = vmatpush1.msra.mxu0 0.0
    %1134 = vmatprep.subr.mxu0 0.0
    %1135 = vmatpush1.msra.mxu0 0.0
    %1136 = vmatprep.subr.mxu0 0.0
    %1137 = vmatpush1.msra.mxu0 0.0
    %1138 = vmatprep.subr.mxu0 0.0
    %1139 = vmatpush1.msra.mxu0 0.0
    %1140 = vmatprep.mubr.f32.mxu0 0.0
    %1141 = vmatmul.mubr.f32.gmra.mrb[0].mxu0 %v1066
    %v1142 = vpop.f32.mrb[0].mxu0
    %v1143 = vadd.f32 0.0, %v1142
    %v1144 = vpop.f32.mrb[0].mxu0
    %1145 = vmatprep.mubr.f32.mxu0 0.0
    %1146 = vmatmul.mubr.f32.gmra.mrb[0].mxu0 %v1069
    %v1147 = vpop.f32.mrb[0].mxu0
    %v1148 = vadd.f32 0.0, %v1147
    %v1149 = vpop.f32.mrb[0].mxu0
    %1150 = vmatprep.mubr.f32.mxu0 0.0
    %1151 = vmatmul.mubr.f32.gmra.mrb[0].mxu0 %v1071
    %v1152 = vpop.f32.mrb[0].mxu0
    %v1153 = vadd.f32 0.0, %v1152
    %v1154 = vpop.f32.mrb[0].mxu0
    %1155 = vmatprep.mubr.f32.mxu0 0.0
    %1156 = vmatmul.mubr.f32.gmra.mrb[0].mxu0 %v1074
    %v1157 = vpop.f32.mrb[0].mxu0
    %v1158 = vadd.f32 0.0, %v1157
    %v1159 = vpop.f32.mrb[0].mxu0
    %1160 = vdwg.mxu0
    %v1161 = vadd.f32 %v1060, %v1143
    %v1162 = vadd.f32 %v1061, %v1148
    %v1163 = vadd.f32 %v1062, %v1153
    %v1164 = vadd.f32 %v1063, %v1158
    %v1165 = vld [vmem:[#allocation5 + $0x80] sm:$0xff]
    %v1166 = vld [vmem:[#allocation5 + $0x88] sm:$0xff]
    %v1167 = vsel %vm60, %v923, 0
    %v1170 = vsel %vm60, %v957, 0
    %v1172 = vsel %vm60, %v935, 0
    %v1175 = vsel %vm60, %v961, 0
    %1177 = vmatprep.subr.mxu0 0.0
    %1178 = vmatpush1.msra.mxu0 %v1165
    %1179 = vmatprep.subr.mxu0 0.0
    %1180 = vmatpush1.msra.mxu0 %v1166
    %1181 = vmatprep.subr.mxu0 0.0
    %1182 = vmatpush1.msra.mxu0 0.0
    %1183 = vmatprep.subr.mxu0 0.0
    %1184 = vmatpush1.msra.mxu0 0.0
    %1185 = vmatprep.subr.mxu0 0.0
    %1186 = vmatpush1.msra.mxu0 0.0
    %1187 = vmatprep.subr.mxu0 0.0
    %1188 = vmatpush1.msra.mxu0 0.0
    %1189 = vmatprep.subr.mxu0 0.0
    %1190 = vmatpush1.msra.mxu0 0.0
    %1191 = vmatprep.subr.mxu0 0.0
    %1192 = vmatpush1.msra.mxu0 0.0
    %1193 = vmatprep.subr.mxu0 0.0
    %1194 = vmatpush1.msra.mxu0 0.0
    %1195 = vmatprep.subr.mxu0 0.0
    %1196 = vmatpush1.msra.mxu0 0.0
    %1197 = vmatprep.subr.mxu0 0.0
    %1198 = vmatpush1.msra.mxu0 0.0
    %1199 = vmatprep.subr.mxu0 0.0
    %1200 = vmatpush1.msra.mxu0 0.0
    %1201 = vmatprep.subr.mxu0 0.0
    %1202 = vmatpush1.msra.mxu0 0.0
    %1203 = vmatprep.subr.mxu0 0.0
    %1204 = vmatpush1.msra.mxu0 0.0
    %1205 = vmatprep.subr.mxu0 0.0
    %1206 = vmatpush1.msra.mxu0 0.0
    %1207 = vmatprep.subr.mxu0 0.0
    %1208 = vmatpush1.msra.mxu0 0.0
    %1209 = vmatprep.subr.mxu0 0.0
    %1210 = vmatpush1.msra.mxu0 0.0
    %1211 = vmatprep.subr.mxu0 0.0
    %1212 = vmatpush1.msra.mxu0 0.0
    %1213 = vmatprep.subr.mxu0 0.0
    %1214 = vmatpush1.msra.mxu0 0.0
    %1215 = vmatprep.subr.mxu0 0.0
    %1216 = vmatpush1.msra.mxu0 0.0
    %1217 = vmatprep.subr.mxu0 0.0
    %1218 = vmatpush1.msra.mxu0 0.0
    %1219 = vmatprep.subr.mxu0 0.0
    %1220 = vmatpush1.msra.mxu0 0.0
    %1221 = vmatprep.subr.mxu0 0.0
    %1222 = vmatpush1.msra.mxu0 0.0
    %1223 = vmatprep.subr.mxu0 0.0
    %1224 = vmatpush1.msra.mxu0 0.0
    %1225 = vmatprep.subr.mxu0 0.0
    %1226 = vmatpush1.msra.mxu0 0.0
    %1227 = vmatprep.subr.mxu0 0.0
    %1228 = vmatpush1.msra.mxu0 0.0
    %1229 = vmatprep.subr.mxu0 0.0
    %1230 = vmatpush1.msra.mxu0 0.0
    %1231 = vmatprep.subr.mxu0 0.0
    %1232 = vmatpush1.msra.mxu0 0.0
    %1233 = vmatprep.subr.mxu0 0.0
    %1234 = vmatpush1.msra.mxu0 0.0
    %1235 = vmatprep.subr.mxu0 0.0
    %1236 = vmatpush1.msra.mxu0 0.0
    %1237 = vmatprep.subr.mxu0 0.0
    %1238 = vmatpush1.msra.mxu0 0.0
    %1239 = vmatprep.subr.mxu0 0.0
    %1240 = vmatpush1.msra.mxu0 0.0
    %1241 = vmatprep.mubr.f32.mxu0 0.0
    %1242 = vmatmul.mubr.f32.gmra.mrb[0].mxu0 %v1167
    %v1243 = vpop.f32.mrb[0].mxu0
    %v1244 = vadd.f32 0.0, %v1243
    %v1245 = vpop.f32.mrb[0].mxu0
    %1246 = vmatprep.mubr.f32.mxu0 0.0
    %1247 = vmatmul.mubr.f32.gmra.mrb[0].mxu0 %v1170
    %v1248 = vpop.f32.mrb[0].mxu0
    %v1249 = vadd.f32 0.0, %v1248
    %v1250 = vpop.f32.mrb[0].mxu0
    %1251 = vmatprep.mubr.f32.mxu0 0.0
    %1252 = vmatmul.mubr.f32.gmra.mrb[0].mxu0 %v1172
    %v1253 = vpop.f32.mrb[0].mxu0
    %v1254 = vadd.f32 0.0, %v1253
    %v1255 = vpop.f32.mrb[0].mxu0
    %1256 = vmatprep.mubr.f32.mxu0 0.0
    %1257 = vmatmul.mubr.f32.gmra.mrb[0].mxu0 %v1175
    %v1258 = vpop.f32.mrb[0].mxu0
    %v1259 = vadd.f32 0.0, %v1258
    %v1260 = vpop.f32.mrb[0].mxu0
    %1261 = vdwg.mxu0
    %v1262 = vadd.f32 %v1161, %v1244
    %v1263 = vadd.f32 %v1162, %v1249
    %v1264 = vadd.f32 %v1163, %v1254
    %v1265 = vadd.f32 %v1164, %v1259
    %v1266 = vld [vmem:[#allocation5 + $0xb0] sm:$0xff]
    %v1267 = vld [vmem:[#allocation5 + $0xb8] sm:$0xff]
    %v1268 = vsel %vm60, %v926, 0
    %v1271 = vsel %vm60, %v958, 0
    %v1273 = vsel %vm60, %v938, 0
    %v1276 = vsel %vm60, %v962, 0
    %1278 = vmatprep.subr.mxu0 0.0
    %1279 = vmatpush1.msra.mxu0 %v1266
    %1280 = vmatprep.subr.mxu0 0.0
    %1281 = vmatpush1.msra.mxu0 %v1267
    %1282 = vmatprep.subr.mxu0 0.0
    %1283 = vmatpush1.msra.mxu0 0.0
    %1284 = vmatprep.subr.mxu0 0.0
    %1285 = vmatpush1.msra.mxu0 0.0
    %1286 = vmatprep.subr.mxu0 0.0
    %1287 = vmatpush1.msra.mxu0 0.0
    %1288 = vmatprep.subr.mxu0 0.0
    %1289 = vmatpush1.msra.mxu0 0.0
    %1290 = vmatprep.subr.mxu0 0.0
    %1291 = vmatpush1.msra.mxu0 0.0
    %1292 = vmatprep.subr.mxu0 0.0
    %1293 = vmatpush1.msra.mxu0 0.0
    %1294 = vmatprep.subr.mxu0 0.0
    %1295 = vmatpush1.msra.mxu0 0.0
    %1296 = vmatprep.subr.mxu0 0.0
    %1297 = vmatpush1.msra.mxu0 0.0
    %1298 = vmatprep.subr.mxu0 0.0
    %1299 = vmatpush1.msra.mxu0 0.0
    %1300 = vmatprep.subr.mxu0 0.0
    %1301 = vmatpush1.msra.mxu0 0.0
    %1302 = vmatprep.subr.mxu0 0.0
    %1303 = vmatpush1.msra.mxu0 0.0
    %1304 = vmatprep.subr.mxu0 0.0
    %1305 = vmatpush1.msra.mxu0 0.0
    %1306 = vmatprep.subr.mxu0 0.0
    %1307 = vmatpush1.msra.mxu0 0.0
    %1308 = vmatprep.subr.mxu0 0.0
    %1309 = vmatpush1.msra.mxu0 0.0
    %1310 = vmatprep.subr.mxu0 0.0
    %1311 = vmatpush1.msra.mxu0 0.0
    %1312 = vmatprep.subr.mxu0 0.0
    %1313 = vmatpush1.msra.mxu0 0.0
    %1314 = vmatprep.subr.mxu0 0.0
    %1315 = vmatpush1.msra.mxu0 0.0
    %1316 = vmatprep.subr.mxu0 0.0
    %1317 = vmatpush1.msra.mxu0 0.0
    %1318 = vmatprep.subr.mxu0 0.0
    %1319 = vmatpush1.msra.mxu0 0.0
    %1320 = vmatprep.subr.mxu0 0.0
    %1321 = vmatpush1.msra.mxu0 0.0
    %1322 = vmatprep.subr.mxu0 0.0
    %1323 = vmatpush1.msra.mxu0 0.0
    %1324 = vmatprep.subr.mxu0 0.0
    %1325 = vmatpush1.msra.mxu0 0.0
    %1326 = vmatprep.subr.mxu0 0.0
    %1327 = vmatpush1.msra.mxu0 0.0
    %1328 = vmatprep.subr.mxu0 0.0
    %1329 = vmatpush1.msra.mxu0 0.0
    %1330 = vmatprep.subr.mxu0 0.0
    %1331 = vmatpush1.msra.mxu0 0.0
    %1332 = vmatprep.subr.mxu0 0.0
    %1333 = vmatpush1.msra.mxu0 0.0
    %1334 = vmatprep.subr.mxu0 0.0
    %1335 = vmatpush1.msra.mxu0 0.0
    %1336 = vmatprep.subr.mxu0 0.0
    %1337 = vmatpush1.msra.mxu0 0.0
    %1338 = vmatprep.subr.mxu0 0.0
    %1339 = vmatpush1.msra.mxu0 0.0
    %1340 = vmatprep.subr.mxu0 0.0
    %1341 = vmatpush1.msra.mxu0 0.0
    %1342 = vmatprep.mubr.f32.mxu0 0.0
    %1343 = vmatmul.mubr.f32.gmra.mrb[0].mxu0 %v1268
    %v1344 = vpop.f32.mrb[0].mxu0
    %v1345 = vadd.f32 0.0, %v1344
    %v1346 = vpop.f32.mrb[0].mxu0
    %1347 = vmatprep.mubr.f32.mxu0 0.0
    %1348 = vmatmul.mubr.f32.gmra.mrb[0].mxu0 %v1271
    %v1349 = vpop.f32.mrb[0].mxu0
    %v1350 = vadd.f32 0.0, %v1349
    %v1351 = vpop.f32.mrb[0].mxu0
    %1352 = vmatprep.mubr.f32.mxu0 0.0
    %1353 = vmatmul.mubr.f32.gmra.mrb[0].mxu0 %v1273
    %v1354 = vpop.f32.mrb[0].mxu0
    %v1355 = vadd.f32 0.0, %v1354
    %v1356 = vpop.f32.mrb[0].mxu0
    %1357 = vmatprep.mubr.f32.mxu0 0.0
    %1358 = vmatmul.mubr.f32.gmra.mrb[0].mxu0 %v1276
    %v1359 = vpop.f32.mrb[0].mxu0
    %v1360 = vadd.f32 0.0, %v1359
    %v1361 = vpop.f32.mrb[0].mxu0
    %1362 = vdwg.mxu0
    %v1363 = vadd.f32 %v1262, %v1345
    %v1364 = vadd.f32 %v1263, %v1350
    %v1365 = vadd.f32 %v1264, %v1355
    %v1366 = vadd.f32 %v1265, %v1360
    %v1371 = vrot.slane %v1363, 1
    %v1372 = vrot.slane %v1364, 1
    %v1373 = vsel %vm461, %v1371, %v1372
    %v1374 = vrot.slane %v1365, 1
    %v1375 = vsel %vm461, %v1372, %v1374
    %v1376 = vrot.slane %v1366, 1
    %v1377 = vsel %vm461, %v1374, %v1376
    %v1383 = vsel %vm461, %v1376, %v1371
    %v1384 = vmax.f32 %v1363, %v1373
    %v1385 = vmax.f32 %v1364, %v1375
    %v1386 = vmax.f32 %v1365, %v1377
    %v1387 = vmax.f32 %v1366, %v1383
    %1392 = vrot.lane.b32.xlu0 %v1384, 120
    %v1393 = vpop.permute.xlu0 %1392
    %1394 = vrot.lane.b32.xlu0 %v1385, 120
    %v1395 = vpop.permute.xlu0 %1394
    %1396 = vrot.lane.b32.xlu0 %v1386, 120
    %v1397 = vpop.permute.xlu0 %1396
    %1398 = vrot.lane.b32.xlu0 %v1387, 120
    %v1399 = vpop.permute.xlu0 %1398
    %v1404 = vmax.f32 %v1384, %v1393
    %v1405 = vmax.f32 %v1385, %v1395
    %v1406 = vmax.f32 %v1386, %v1397
    %v1407 = vmax.f32 %v1387, %v1399
    %v1408 = vld [vmem:[#allocation5 + $0x360] sm:$0x1]
    %v1409 = vlaneseq
    %v1410 = vshrl.u32 %v1409, 7
    %v1411 = vsub.s32 0, %v1410
    %v1412 = vrot.slane %v1408, %v1411
    %v1413 = vadd.f32 %v1404, %v1412
    %v1414 = vadd.f32 %v1405, %v1412
    %v1415 = vadd.f32 %v1406, %v1412
    %v1416 = vadd.f32 %v1407, %v1412
    %v1417 = vmax.f32 %v1413, 0.0
    %v1418 = vmax.f32 %v1414, 0.0
    %v1419 = vmax.f32 %v1415, 0.0
    %v1420 = vmax.f32 %v1416, 0.0
    %v1421 = vld [vmem:[#allocation5 + $0xc0] sm:$0xff]
    %v1422 = vld [vmem:[#allocation5 + $0xc8] sm:$0xff]
    %v1423 = vld [vmem:[#allocation5 + $0xd0] sm:$0xff]
    %v1424 = vld [vmem:[#allocation5 + $0xd8] sm:$0xff]
    %v1425 = vld [vmem:[#allocation5 + $0xe0] sm:$0xff]
    %v1426 = vld [vmem:[#allocation5 + $0xe8] sm:$0xff]
    %v1427 = vld [vmem:[#allocation5 + $0xf0] sm:$0xff]
    %v1428 = vld [vmem:[#allocation5 + $0xf8] sm:$0xff]
    %v1429 = vld [vmem:[#allocation5 + $0x100] sm:$0xff]
    %v1430 = vld [vmem:[#allocation5 + $0x108] sm:$0xff]
    %v1431 = vld [vmem:[#allocation5 + $0x110] sm:$0xff]
    %v1432 = vld [vmem:[#allocation5 + $0x118] sm:$0xff]
    %v1433 = vld [vmem:[#allocation5 + $0x120] sm:$0xff]
    %v1434 = vld [vmem:[#allocation5 + $0x128] sm:$0xff]
    %v1435 = vld [vmem:[#allocation5 + $0x130] sm:$0xff]
    %v1436 = vld [vmem:[#allocation5 + $0x138] sm:$0xff]
    %v1441 = vrot.slane %v1417, 2
    %v1442 = vrot.slane %v1418, 2
    %v1443 = vsel %vm914, %v1441, %v1442
    %v1444 = vrot.slane %v1419, 2
    %v1445 = vsel %vm914, %v1442, %v1444
    %v1446 = vrot.slane %v1420, 2
    %v1447 = vsel %vm914, %v1444, %v1446
    %v1453 = vsel %vm914, %v1446, %v1441
    %v1454 = vld [vmem:[#allocation5 + $0x140] sm:$0xff]
    %v1455 = vld [vmem:[#allocation5 + $0x148] sm:$0xff]
    %v1456 = vld [vmem:[#allocation5 + $0x150] sm:$0xff]
    %v1457 = vld [vmem:[#allocation5 + $0x158] sm:$0xff]
    %v1458 = vld [vmem:[#allocation5 + $0x160] sm:$0xff]
    %v1459 = vld [vmem:[#allocation5 + $0x168] sm:$0xff]
    %v1460 = vld [vmem:[#allocation5 + $0x170] sm:$0xff]
    %v1461 = vld [vmem:[#allocation5 + $0x178] sm:$0xff]
    %v1462 = vld [vmem:[#allocation5 + $0x180] sm:$0xff]
    %v1463 = vld [vmem:[#allocation5 + $0x188] sm:$0xff]
    %v1464 = vld [vmem:[#allocation5 + $0x190] sm:$0xff]
    %v1465 = vld [vmem:[#allocation5 + $0x198] sm:$0xff]
    %v1466 = vld [vmem:[#allocation5 + $0x1a0] sm:$0xff]
    %v1467 = vld [vmem:[#allocation5 + $0x1a8] sm:$0xff]
    %v1468 = vld [vmem:[#allocation5 + $0x1b0] sm:$0xff]
    %v1469 = vld [vmem:[#allocation5 + $0x1b8] sm:$0xff]
    %1470 = vmatprep.subr.mxu0 0.0
    %1471 = vmatpush1.msra.mxu0 %v1454
    %1472 = vmatprep.subr.mxu0 0.0
    %1473 = vmatpush1.msra.mxu0 %v1455
    %1474 = vmatprep.subr.mxu0 0.0
    %1475 = vmatpush1.msra.mxu0 %v1456
    %1476 = vmatprep.subr.mxu0 0.0
    %1477 = vmatpush1.msra.mxu0 %v1457
    %1478 = vmatprep.subr.mxu0 0.0
    %1479 = vmatpush1.msra.mxu0 %v1458
    %1480 = vmatprep.subr.mxu0 0.0
    %1481 = vmatpush1.msra.mxu0 %v1459
    %1482 = vmatprep.subr.mxu0 0.0
    %1483 = vmatpush1.msra.mxu0 %v1460
    %1484 = vmatprep.subr.mxu0 0.0
    %1485 = vmatpush1.msra.mxu0 %v1461
    %1486 = vmatprep.subr.mxu0 0.0
    %1487 = vmatpush1.msra.mxu0 %v1462
    %1488 = vmatprep.subr.mxu0 0.0
    %1489 = vmatpush1.msra.mxu0 %v1463
    %1490 = vmatprep.subr.mxu0 0.0
    %1491 = vmatpush1.msra.mxu0 %v1464
    %1492 = vmatprep.subr.mxu0 0.0
    %1493 = vmatpush1.msra.mxu0 %v1465
    %1494 = vmatprep.subr.mxu0 0.0
    %1495 = vmatpush1.msra.mxu0 %v1466
    %1496 = vmatprep.subr.mxu0 0.0
    %1497 = vmatpush1.msra.mxu0 %v1467
    %1498 = vmatprep.subr.mxu0 0.0
    %1499 = vmatpush1.msra.mxu0 %v1468
    %1500 = vmatprep.subr.mxu0 0.0
    %1501 = vmatpush1.msra.mxu0 %v1469
    %1502 = vmatprep.subr.mxu0 0.0
    %1503 = vmatpush1.msra.mxu0 0.0
    %1504 = vmatprep.subr.mxu0 0.0
    %1505 = vmatpush1.msra.mxu0 0.0
    %1506 = vmatprep.subr.mxu0 0.0
    %1507 = vmatpush1.msra.mxu0 0.0
    %1508 = vmatprep.subr.mxu0 0.0
    %1509 = vmatpush1.msra.mxu0 0.0
    %1510 = vmatprep.subr.mxu0 0.0
    %1511 = vmatpush1.msra.mxu0 0.0
    %1512 = vmatprep.subr.mxu0 0.0
    %1513 = vmatpush1.msra.mxu0 0.0
    %1514 = vmatprep.subr.mxu0 0.0
    %1515 = vmatpush1.msra.mxu0 0.0
    %1516 = vmatprep.subr.mxu0 0.0
    %1517 = vmatpush1.msra.mxu0 0.0
    %1518 = vmatprep.subr.mxu0 0.0
    %1519 = vmatpush1.msra.mxu0 0.0
    %1520 = vmatprep.subr.mxu0 0.0
    %1521 = vmatpush1.msra.mxu0 0.0
    %1522 = vmatprep.subr.mxu0 0.0
    %1523 = vmatpush1.msra.mxu0 0.0
    %1524 = vmatprep.subr.mxu0 0.0
    %1525 = vmatpush1.msra.mxu0 0.0
    %1526 = vmatprep.subr.mxu0 0.0
    %1527 = vmatpush1.msra.mxu0 0.0
    %1528 = vmatprep.subr.mxu0 0.0
    %1529 = vmatpush1.msra.mxu0 0.0
    %1530 = vmatprep.subr.mxu0 0.0
    %1531 = vmatpush1.msra.mxu0 0.0
    %1532 = vmatprep.subr.mxu0 0.0
    %1533 = vmatpush1.msra.mxu0 0.0
    %1534 = vmatprep.mubr.f32.mxu0 0.0
    %1535 = vmatmul.mubr.f32.gmra.mrb[0].mxu0 %v1443
    %v1536 = vpop.f32.mrb[0].mxu0
    %v1537 = vadd.f32 0.0, %v1536
    %v1538 = vpop.f32.mrb[0].mxu0
    %1539 = vmatprep.mubr.f32.mxu0 0.0
    %1540 = vmatmul.mubr.f32.gmra.mrb[0].mxu0 %v1445
    %v1541 = vpop.f32.mrb[0].mxu0
    %v1542 = vadd.f32 0.0, %v1541
    %v1543 = vpop.f32.mrb[0].mxu0
    %1544 = vmatprep.mubr.f32.mxu0 0.0
    %1545 = vmatmul.mubr.f32.gmra.mrb[0].mxu0 %v1447
    %v1546 = vpop.f32.mrb[0].mxu0
    %v1547 = vadd.f32 0.0, %v1546
    %v1548 = vpop.f32.mrb[0].mxu0
    %1549 = vmatprep.mubr.f32.mxu0 0.0
    %1550 = vmatmul.mubr.f32.gmra.mrb[0].mxu0 %v1453
    %v1551 = vpop.f32.mrb[0].mxu0
    %v1552 = vadd.f32 0.0, %v1551
    %v1553 = vpop.f32.mrb[0].mxu0
    %1554 = vdwg.mxu0
    %1555 = vmatprep.subr.mxu0 0.0
    %1556 = vmatpush1.msra.mxu0 %v1421
    %1557 = vmatprep.subr.mxu0 0.0
    %1558 = vmatpush1.msra.mxu0 %v1422
    %1559 = vmatprep.subr.mxu0 0.0
    %1560 = vmatpush1.msra.mxu0 %v1423
    %1561 = vmatprep.subr.mxu0 0.0
    %1562 = vmatpush1.msra.mxu0 %v1424
    %1563 = vmatprep.subr.mxu0 0.0
    %1564 = vmatpush1.msra.mxu0 %v1425
    %1565 = vmatprep.subr.mxu0 0.0
    %1566 = vmatpush1.msra.mxu0 %v1426
    %1567 = vmatprep.subr.mxu0 0.0
    %1568 = vmatpush1.msra.mxu0 %v1427
    %1569 = vmatprep.subr.mxu0 0.0
    %1570 = vmatpush1.msra.mxu0 %v1428
    %1571 = vmatprep.subr.mxu0 0.0
    %1572 = vmatpush1.msra.mxu0 %v1429
    %1573 = vmatprep.subr.mxu0 0.0
    %1574 = vmatpush1.msra.mxu0 %v1430
    %1575 = vmatprep.subr.mxu0 0.0
    %1576 = vmatpush1.msra.mxu0 %v1431
    %1577 = vmatprep.subr.mxu0 0.0
    %1578 = vmatpush1.msra.mxu0 %v1432
    %1579 = vmatprep.subr.mxu0 0.0
    %1580 = vmatpush1.msra.mxu0 %v1433
    %1581 = vmatprep.subr.mxu0 0.0
    %1582 = vmatpush1.msra.mxu0 %v1434
    %1583 = vmatprep.subr.mxu0 0.0
    %1584 = vmatpush1.msra.mxu0 %v1435
    %1585 = vmatprep.subr.mxu0 0.0
    %1586 = vmatpush1.msra.mxu0 %v1436
    %1587 = vmatprep.subr.mxu0 0.0
    %1588 = vmatpush1.msra.mxu0 0.0
    %1589 = vmatprep.subr.mxu0 0.0
    %1590 = vmatpush1.msra.mxu0 0.0
    %1591 = vmatprep.subr.mxu0 0.0
    %1592 = vmatpush1.msra.mxu0 0.0
    %1593 = vmatprep.subr.mxu0 0.0
    %1594 = vmatpush1.msra.mxu0 0.0
    %1595 = vmatprep.subr.mxu0 0.0
    %1596 = vmatpush1.msra.mxu0 0.0
    %1597 = vmatprep.subr.mxu0 0.0
    %1598 = vmatpush1.msra.mxu0 0.0
    %1599 = vmatprep.subr.mxu0 0.0
    %1600 = vmatpush1.msra.mxu0 0.0
    %1601 = vmatprep.subr.mxu0 0.0
    %1602 = vmatpush1.msra.mxu0 0.0
    %1603 = vmatprep.subr.mxu0 0.0
    %1604 = vmatpush1.msra.mxu0 0.0
    %1605 = vmatprep.subr.mxu0 0.0
    %1606 = vmatpush1.msra.mxu0 0.0
    %1607 = vmatprep.subr.mxu0 0.0
    %1608 = vmatpush1.msra.mxu0 0.0
    %1609 = vmatprep.subr.mxu0 0.0
    %1610 = vmatpush1.msra.mxu0 0.0
    %1611 = vmatprep.subr.mxu0 0.0
    %1612 = vmatpush1.msra.mxu0 0.0
    %1613 = vmatprep.subr.mxu0 0.0
    %1614 = vmatpush1.msra.mxu0 0.0
    %1615 = vmatprep.subr.mxu0 0.0
    %1616 = vmatpush1.msra.mxu0 0.0
    %1617 = vmatprep.subr.mxu0 0.0
    %1618 = vmatpush1.msra.mxu0 0.0
    %1619 = vmatprep.mubr.f32.mxu0 0.0
    %1620 = vmatmul.mubr.f32.gmra.mrb[0].mxu0 %v1417
    %v1621 = vpop.f32.mrb[0].mxu0
    %v1622 = vadd.f32 %v1537, %v1621
    %v1623 = vpop.f32.mrb[0].mxu0
    %1624 = vmatprep.mubr.f32.mxu0 0.0
    %1625 = vmatmul.mubr.f32.gmra.mrb[0].mxu0 %v1418
    %v1626 = vpop.f32.mrb[0].mxu0
    %v1627 = vadd.f32 %v1542, %v1626
    %v1628 = vpop.f32.mrb[0].mxu0
    %1629 = vmatprep.mubr.f32.mxu0 0.0
    %1630 = vmatmul.mubr.f32.gmra.mrb[0].mxu0 %v1419
    %v1631 = vpop.f32.mrb[0].mxu0
    %v1632 = vadd.f32 %v1547, %v1631
    %v1633 = vpop.f32.mrb[0].mxu0
    %1634 = vmatprep.mubr.f32.mxu0 0.0
    %1635 = vmatmul.mubr.f32.gmra.mrb[0].mxu0 %v1420
    %v1636 = vpop.f32.mrb[0].mxu0
    %v1637 = vadd.f32 %v1552, %v1636
    %v1638 = vpop.f32.mrb[0].mxu0
    %1639 = vdwg.mxu0
    %vm1640 = vcmask 1043456
    %v1641 = vrot.slane %v1417, 4
    %v1642 = vrot.slane %v1418, 4
    %v1643 = vsel %vm1640, %v1641, %v1642
    %v1644 = vrot.slane %v1419, 4
    %v1645 = vsel %vm1640, %v1642, %v1644
    %v1646 = vrot.slane %v1420, 4
    %v1647 = vsel %vm1640, %v1644, %v1646
    %v1653 = vsel %vm1640, %v1646, %v1641
    %v1654 = vld [vmem:[#allocation5 + $0x1c0] sm:$0xff]
    %v1655 = vld [vmem:[#allocation5 + $0x1c8] sm:$0xff]
    %v1656 = vld [vmem:[#allocation5 + $0x1d0] sm:$0xff]
    %v1657 = vld [vmem:[#allocation5 + $0x1d8] sm:$0xff]
    %v1658 = vld [vmem:[#allocation5 + $0x1e0] sm:$0xff]
    %v1659 = vld [vmem:[#allocation5 + $0x1e8] sm:$0xff]
    %v1660 = vld [vmem:[#allocation5 + $0x1f0] sm:$0xff]
    %v1661 = vld [vmem:[#allocation5 + $0x1f8] sm:$0xff]
    %v1662 = vld [vmem:[#allocation5 + $0x200] sm:$0xff]
    %v1663 = vld [vmem:[#allocation5 + $0x208] sm:$0xff]
    %v1664 = vld [vmem:[#allocation5 + $0x210] sm:$0xff]
    %v1665 = vld [vmem:[#allocation5 + $0x218] sm:$0xff]
    %v1666 = vld [vmem:[#allocation5 + $0x220] sm:$0xff]
    %v1667 = vld [vmem:[#allocation5 + $0x228] sm:$0xff]
    %v1668 = vld [vmem:[#allocation5 + $0x230] sm:$0xff]
    %v1669 = vld [vmem:[#allocation5 + $0x238] sm:$0xff]
    %1670 = vmatprep.subr.mxu0 0.0
    %1671 = vmatpush1.msra.mxu0 %v1654
    %1672 = vmatprep.subr.mxu0 0.0
    %1673 = vmatpush1.msra.mxu0 %v1655
    %1674 = vmatprep.subr.mxu0 0.0
    %1675 = vmatpush1.msra.mxu0 %v1656
    %1676 = vmatprep.subr.mxu0 0.0
    %1677 = vmatpush1.msra.mxu0 %v1657
    %1678 = vmatprep.subr.mxu0 0.0
    %1679 = vmatpush1.msra.mxu0 %v1658
    %1680 = vmatprep.subr.mxu0 0.0
    %1681 = vmatpush1.msra.mxu0 %v1659
    %1682 = vmatprep.subr.mxu0 0.0
    %1683 = vmatpush1.msra.mxu0 %v1660
    %1684 = vmatprep.subr.mxu0 0.0
    %1685 = vmatpush1.msra.mxu0 %v1661
    %1686 = vmatprep.subr.mxu0 0.0
    %1687 = vmatpush1.msra.mxu0 %v1662
    %1688 = vmatprep.subr.mxu0 0.0
    %1689 = vmatpush1.msra.mxu0 %v1663
    %1690 = vmatprep.subr.mxu0 0.0
    %1691 = vmatpush1.msra.mxu0 %v1664
    %1692 = vmatprep.subr.mxu0 0.0
    %1693 = vmatpush1.msra.mxu0 %v1665
    %1694 = vmatprep.subr.mxu0 0.0
    %1695 = vmatpush1.msra.mxu0 %v1666
    %1696 = vmatprep.subr.mxu0 0.0
    %1697 = vmatpush1.msra.mxu0 %v1667
    %1698 = vmatprep.subr.mxu0 0.0
    %1699 = vmatpush1.msra.mxu0 %v1668
    %1700 = vmatprep.subr.mxu0 0.0
    %1701 = vmatpush1.msra.mxu0 %v1669
    %1702 = vmatprep.subr.mxu0 0.0
    %1703 = vmatpush1.msra.mxu0 0.0
    %1704 = vmatprep.subr.mxu0 0.0
    %1705 = vmatpush1.msra.mxu0 0.0
    %1706 = vmatprep.subr.mxu0 0.0
    %1707 = vmatpush1.msra.mxu0 0.0
    %1708 = vmatprep.subr.mxu0 0.0
    %1709 = vmatpush1.msra.mxu0 0.0
    %1710 = vmatprep.subr.mxu0 0.0
    %1711 = vmatpush1.msra.mxu0 0.0
    %1712 = vmatprep.subr.mxu0 0.0
    %1713 = vmatpush1.msra.mxu0 0.0
    %1714 = vmatprep.subr.mxu0 0.0
    %1715 = vmatpush1.msra.mxu0 0.0
    %1716 = vmatprep.subr.mxu0 0.0
    %1717 = vmatpush1.msra.mxu0 0.0
    %1718 = vmatprep.subr.mxu0 0.0
    %1719 = vmatpush1.msra.mxu0 0.0
    %1720 = vmatprep.subr.mxu0 0.0
    %1721 = vmatpush1.msra.mxu0 0.0
    %1722 = vmatprep.subr.mxu0 0.0
    %1723 = vmatpush1.msra.mxu0 0.0
    %1724 = vmatprep.subr.mxu0 0.0
    %1725 = vmatpush1.msra.mxu0 0.0
    %1726 = vmatprep.subr.mxu0 0.0
    %1727 = vmatpush1.msra.mxu0 0.0
    %1728 = vmatprep.subr.mxu0 0.0
    %1729 = vmatpush1.msra.mxu0 0.0
    %1730 = vmatprep.subr.mxu0 0.0
    %1731 = vmatpush1.msra.mxu0 0.0
    %1732 = vmatprep.subr.mxu0 0.0
    %1733 = vmatpush1.msra.mxu0 0.0
    %1734 = vmatprep.mubr.f32.mxu0 0.0
    %1735 = vmatmul.mubr.f32.gmra.mrb[0].mxu0 %v1643
    %v1736 = vpop.f32.mrb[0].mxu0
    %v1737 = vadd.f32 0.0, %v1736
    %v1738 = vpop.f32.mrb[0].mxu0
    %1739 = vmatprep.mubr.f32.mxu0 0.0
    %1740 = vmatmul.mubr.f32.gmra.mrb[0].mxu0 %v1645
    %v1741 = vpop.f32.mrb[0].mxu0
    %v1742 = vadd.f32 0.0, %v1741
    %v1743 = vpop.f32.mrb[0].mxu0
    %1744 = vmatprep.mubr.f32.mxu0 0.0
    %1745 = vmatmul.mubr.f32.gmra.mrb[0].mxu0 %v1647
    %v1746 = vpop.f32.mrb[0].mxu0
    %v1747 = vadd.f32 0.0, %v1746
    %v1748 = vpop.f32.mrb[0].mxu0
    %1749 = vmatprep.mubr.f32.mxu0 0.0
    %1750 = vmatmul.mubr.f32.gmra.mrb[0].mxu0 %v1653
    %v1751 = vpop.f32.mrb[0].mxu0
    %v1752 = vadd.f32 0.0, %v1751
    %v1753 = vpop.f32.mrb[0].mxu0
    %1754 = vdwg.mxu0
    %v1755 = vadd.f32 %v1622, %v1737
    %v1756 = vadd.f32 %v1627, %v1742
    %v1757 = vadd.f32 %v1632, %v1747
    %v1758 = vadd.f32 %v1637, %v1752
    %v1763 = vrot.slane %v1755, 2
    %v1764 = vrot.slane %v1756, 2
    %v1765 = vsel %vm914, %v1763, %v1764
    %v1766 = vrot.slane %v1757, 2
    %v1767 = vrot.slane %v1758, 2
    %v1768 = vsel %vm914, %v1766, %v1767
    %v1771 = vmax.f32 %v1755, %v1765
    %v1772 = vmax.f32 %v1757, %v1768
    %1775 = vrot.lane.b32.xlu0 %v1771, 112
    %v1776 = vpop.permute.xlu0 %1775
    %1777 = vrot.lane.b32.xlu0 %v1772, 112
    %v1778 = vpop.permute.xlu0 %1777
    %v1781 = vmax.f32 %v1771, %v1776
    %v1782 = vmax.f32 %v1772, %v1778
    %v1783 = vld [vmem:[#allocation5 + $0x361] sm:$0x1]
    %v1784 = vlaneseq
    %v1785 = vshrl.u32 %v1784, 7
    %v1786 = vsub.s32 0, %v1785
    %v1787 = vrot.slane %v1783, %v1786
    %v1788 = vadd.f32 %v1781, %v1787
    %v1789 = vadd.f32 %v1782, %v1787
    %v1790 = vmax.f32 %v1788, 0.0
    %v1791 = vmax.f32 %v1789, 0.0
    %v1793 = vrot.slane %v1791, 7
    %vm1795 = vcmask 1040384
    %v1796 = vsel %vm1795, %v1790, %v1793
    %v1797 = vld [vmem:[#allocation5 + $0x240] sm:$0xff]
    %v1798 = vld [vmem:[#allocation5 + $0x248] sm:$0xff]
    %v1799 = vld [vmem:[#allocation5 + $0x250] sm:$0xff]
    %v1800 = vld [vmem:[#allocation5 + $0x258] sm:$0xff]
    %v1801 = vld [vmem:[#allocation5 + $0x260] sm:$0xff]
    %v1802 = vld [vmem:[#allocation5 + $0x268] sm:$0xff]
    %v1803 = vld [vmem:[#allocation5 + $0x270] sm:$0xff]
    %v1804 = vld [vmem:[#allocation5 + $0x278] sm:$0xff]
    %v1805 = vld [vmem:[#allocation5 + $0x280] sm:$0xff]
    %v1806 = vld [vmem:[#allocation5 + $0x288] sm:$0xff]
    %v1807 = vld [vmem:[#allocation5 + $0x290] sm:$0xff]
    %v1808 = vld [vmem:[#allocation5 + $0x298] sm:$0xff]
    %v1809 = vld [vmem:[#allocation5 + $0x2a0] sm:$0xff]
    %v1810 = vld [vmem:[#allocation5 + $0x2a8] sm:$0xff]
    %v1811 = vld [vmem:[#allocation5 + $0x2b0] sm:$0xff]
    %v1812 = vld [vmem:[#allocation5 + $0x2b8] sm:$0xff]
    %v1814 = vrot.slane %v1790, 4
    %v1816 = vrot.slane %v1791, 3
    %v1818 = vsel %vm1795, %v1814, %v1816
    %v1819 = vld [vmem:[#allocation5 + $0x2c0] sm:$0xff]
    %v1820 = vld [vmem:[#allocation5 + $0x2c8] sm:$0xff]
    %v1821 = vld [vmem:[#allocation5 + $0x2d0] sm:$0xff]
    %v1822 = vld [vmem:[#allocation5 + $0x2d8] sm:$0xff]
    %v1823 = vld [vmem:[#allocation5 + $0x2e0] sm:$0xff]
    %v1824 = vld [vmem:[#allocation5 + $0x2e8] sm:$0xff]
    %v1825 = vld [vmem:[#allocation5 + $0x2f0] sm:$0xff]
    %v1826 = vld [vmem:[#allocation5 + $0x2f8] sm:$0xff]
    %v1827 = vld [vmem:[#allocation5 + $0x300] sm:$0xff]
    %v1828 = vld [vmem:[#allocation5 + $0x308] sm:$0xff]
    %v1829 = vld [vmem:[#allocation5 + $0x310] sm:$0xff]
    %v1830 = vld [vmem:[#allocation5 + $0x318] sm:$0xff]
    %v1831 = vld [vmem:[#allocation5 + $0x320] sm:$0xff]
    %v1832 = vld [vmem:[#allocation5 + $0x328] sm:$0xff]
    %v1833 = vld [vmem:[#allocation5 + $0x330] sm:$0xff]
    %v1834 = vld [vmem:[#allocation5 + $0x338] sm:$0xff]
    %1835 = vmatprep.subr.mxu0 0.0
    %1836 = vmatpush1.msra.mxu0 %v1819
    %1837 = vmatprep.subr.mxu0 0.0
    %1838 = vmatpush1.msra.mxu0 %v1820
    %1839 = vmatprep.subr.mxu0 0.0
    %1840 = vmatpush1.msra.mxu0 %v1821
    %1841 = vmatprep.subr.mxu0 0.0
    %1842 = vmatpush1.msra.mxu0 %v1822
    %1843 = vmatprep.subr.mxu0 0.0
    %1844 = vmatpush1.msra.mxu0 %v1823
    %1845 = vmatprep.subr.mxu0 0.0
    %1846 = vmatpush1.msra.mxu0 %v1824
    %1847 = vmatprep.subr.mxu0 0.0
    %1848 = vmatpush1.msra.mxu0 %v1825
    %1849 = vmatprep.subr.mxu0 0.0
    %1850 = vmatpush1.msra.mxu0 %v1826
    %1851 = vmatprep.subr.mxu0 0.0
    %1852 = vmatpush1.msra.mxu0 %v1827
    %1853 = vmatprep.subr.mxu0 0.0
    %1854 = vmatpush1.msra.mxu0 %v1828
    %1855 = vmatprep.subr.mxu0 0.0
    %1856 = vmatpush1.msra.mxu0 %v1829
    %1857 = vmatprep.subr.mxu0 0.0
    %1858 = vmatpush1.msra.mxu0 %v1830
    %1859 = vmatprep.subr.mxu0 0.0
    %1860 = vmatpush1.msra.mxu0 %v1831
    %1861 = vmatprep.subr.mxu0 0.0
    %1862 = vmatpush1.msra.mxu0 %v1832
    %1863 = vmatprep.subr.mxu0 0.0
    %1864 = vmatpush1.msra.mxu0 %v1833
    %1865 = vmatprep.subr.mxu0 0.0
    %1866 = vmatpush1.msra.mxu0 %v1834
    %1867 = vmatprep.subr.mxu0 0.0
    %1868 = vmatpush1.msra.mxu0 0.0
    %1869 = vmatprep.subr.mxu0 0.0
    %1870 = vmatpush1.msra.mxu0 0.0
    %1871 = vmatprep.subr.mxu0 0.0
    %1872 = vmatpush1.msra.mxu0 0.0
    %1873 = vmatprep.subr.mxu0 0.0
    %1874 = vmatpush1.msra.mxu0 0.0
    %1875 = vmatprep.subr.mxu0 0.0
    %1876 = vmatpush1.msra.mxu0 0.0
    %1877 = vmatprep.subr.mxu0 0.0
    %1878 = vmatpush1.msra.mxu0 0.0
    %1879 = vmatprep.subr.mxu0 0.0
    %1880 = vmatpush1.msra.mxu0 0.0
    %1881 = vmatprep.subr.mxu0 0.0
    %1882 = vmatpush1.msra.mxu0 0.0
    %1883 = vmatprep.subr.mxu0 0.0
    %1884 = vmatpush1.msra.mxu0 0.0
    %1885 = vmatprep.subr.mxu0 0.0
    %1886 = vmatpush1.msra.mxu0 0.0
    %1887 = vmatprep.subr.mxu0 0.0
    %1888 = vmatpush1.msra.mxu0 0.0
    %1889 = vmatprep.subr.mxu0 0.0
    %1890 = vmatpush1.msra.mxu0 0.0
    %1891 = vmatprep.subr.mxu0 0.0
    %1892 = vmatpush1.msra.mxu0 0.0
    %1893 = vmatprep.subr.mxu0 0.0
    %1894 = vmatpush1.msra.mxu0 0.0
    %1895 = vmatprep.subr.mxu0 0.0
    %1896 = vmatpush1.msra.mxu0 0.0
    %1897 = vmatprep.subr.mxu0 0.0
    %1898 = vmatpush1.msra.mxu0 0.0
    %1899 = vmatprep.mubr.f32.mxu0 0.0
    %1900 = vmatmul.mubr.f32.gmra.mrb[0].mxu0 %v1818
    %v1901 = vpop.f32.mrb[0].mxu0
    %v1902 = vadd.f32 0.0, %v1901
    %v1903 = vpop.f32.mrb[0].mxu0
    %1904 = vdwg.mxu0
    %1905 = vmatprep.subr.mxu0 0.0
    %1906 = vmatpush1.msra.mxu0 %v1797
    %1907 = vmatprep.subr.mxu0 0.0
    %1908 = vmatpush1.msra.mxu0 %v1798
    %1909 = vmatprep.subr.mxu0 0.0
    %1910 = vmatpush1.msra.mxu0 %v1799
    %1911 = vmatprep.subr.mxu0 0.0
    %1912 = vmatpush1.msra.mxu0 %v1800
    %1913 = vmatprep.subr.mxu0 0.0
    %1914 = vmatpush1.msra.mxu0 %v1801
    %1915 = vmatprep.subr.mxu0 0.0
    %1916 = vmatpush1.msra.mxu0 %v1802
    %1917 = vmatprep.subr.mxu0 0.0
    %1918 = vmatpush1.msra.mxu0 %v1803
    %1919 = vmatprep.subr.mxu0 0.0
    %1920 = vmatpush1.msra.mxu0 %v1804
    %1921 = vmatprep.subr.mxu0 0.0
    %1922 = vmatpush1.msra.mxu0 %v1805
    %1923 = vmatprep.subr.mxu0 0.0
    %1924 = vmatpush1.msra.mxu0 %v1806
    %1925 = vmatprep.subr.mxu0 0.0
    %1926 = vmatpush1.msra.mxu0 %v1807
    %1927 = vmatprep.subr.mxu0 0.0
    %1928 = vmatpush1.msra.mxu0 %v1808
    %1929 = vmatprep.subr.mxu0 0.0
    %1930 = vmatpush1.msra.mxu0 %v1809
    %1931 = vmatprep.subr.mxu0 0.0
    %1932 = vmatpush1.msra.mxu0 %v1810
    %1933 = vmatprep.subr.mxu0 0.0
    %1934 = vmatpush1.msra.mxu0 %v1811
    %1935 = vmatprep.subr.mxu0 0.0
    %1936 = vmatpush1.msra.mxu0 %v1812
    %1937 = vmatprep.subr.mxu0 0.0
    %1938 = vmatpush1.msra.mxu0 0.0
    %1939 = vmatprep.subr.mxu0 0.0
    %1940 = vmatpush1.msra.mxu0 0.0
    %1941 = vmatprep.subr.mxu0 0.0
    %1942 = vmatpush1.msra.mxu0 0.0
    %1943 = vmatprep.subr.mxu0 0.0
    %1944 = vmatpush1.msra.mxu0 0.0
    %1945 = vmatprep.subr.mxu0 0.0
    %1946 = vmatpush1.msra.mxu0 0.0
    %1947 = vmatprep.subr.mxu0 0.0
    %1948 = vmatpush1.msra.mxu0 0.0
    %1949 = vmatprep.subr.mxu0 0.0
    %1950 = vmatpush1.msra.mxu0 0.0
    %1951 = vmatprep.subr.mxu0 0.0
    %1952 = vmatpush1.msra.mxu0 0.0
    %1953 = vmatprep.subr.mxu0 0.0
    %1954 = vmatpush1.msra.mxu0 0.0
    %1955 = vmatprep.subr.mxu0 0.0
    %1956 = vmatpush1.msra.mxu0 0.0
    %1957 = vmatprep.subr.mxu0 0.0
    %1958 = vmatpush1.msra.mxu0 0.0
    %1959 = vmatprep.subr.mxu0 0.0
    %1960 = vmatpush1.msra.mxu0 0.0
    %1961 = vmatprep.subr.mxu0 0.0
    %1962 = vmatpush1.msra.mxu0 0.0
    %1963 = vmatprep.subr.mxu0 0.0
    %1964 = vmatpush1.msra.mxu0 0.0
    %1965 = vmatprep.subr.mxu0 0.0
    %1966 = vmatpush1.msra.mxu0 0.0
    %1967 = vmatprep.subr.mxu0 0.0
    %1968 = vmatpush1.msra.mxu0 0.0
    %1969 = vmatprep.mubr.f32.mxu0 0.0
    %1970 = vmatmul.mubr.f32.gmra.mrb[0].mxu0 %v1796
    %v1971 = vpop.f32.mrb[0].mxu0
    %v1972 = vadd.f32 %v1902, %v1971
    %v1973 = vpop.f32.mrb[0].mxu0
    %1974 = vdwg.mxu0
    %v1975 = vld [vmem:[#allocation5 + $0x362] sm:$0x1]
    %v1976 = vlaneseq
    %v1977 = vshrl.u32 %v1976, 7
    %v1978 = vsub.s32 0, %v1977
    %v1979 = vrot.slane %v1975, %v1978
    %v1980 = vadd.f32 %v1972, %v1979
    %v1981 = vmax.f32 %v1980, 0.0
    %v1982 = vld [vmem:[#allocation5 + $0x340] sm:$0xff]
    %v1983 = vld [vmem:[#allocation5 + $0x348] sm:$0xff]
    %v1984 = vld [vmem:[#allocation5 + $0x350] sm:$0xff]
    %v1985 = vld [vmem:[#allocation5 + $0x358] sm:$0xff]
    %v1986 = vld [vmem:[#allocation5 + $0x363] sm:$0x1]
    %v1987 = vlaneseq
    %v1988 = vshrl.u32 %v1987, 7
    %v1989 = vsub.s32 0, %v1988
    %v1990 = vrot.slane %v1986, %v1989
    %vm1991 = vcmask 261120
    %v1993 = vsel %vm1991, %v1981, 0
    %1995 = vmatprep.subr.mxu0 0.0
    %1996 = vmatpush1.msra.mxu0 %v1982
    %1997 = vmatprep.subr.mxu0 0.0
    %1998 = vmatpush1.msra.mxu0 %v1983
    %1999 = vmatprep.subr.mxu0 0.0
    %2000 = vmatpush1.msra.mxu0 %v1984
    %2001 = vmatprep.subr.mxu0 0.0
    %2002 = vmatpush1.msra.mxu0 %v1985
    %2003 = vmatprep.subr.mxu0 0.0
    %2004 = vmatpush1.msra.mxu0 0.0
    %2005 = vmatprep.subr.mxu0 0.0
    %2006 = vmatpush1.msra.mxu0 0.0
    %2007 = vmatprep.subr.mxu0 0.0
    %2008 = vmatpush1.msra.mxu0 0.0
    %2009 = vmatprep.subr.mxu0 0.0
    %2010 = vmatpush1.msra.mxu0 0.0
    %2011 = vmatprep.subr.mxu0 0.0
    %2012 = vmatpush1.msra.mxu0 0.0
    %2013 = vmatprep.subr.mxu0 0.0
    %2014 = vmatpush1.msra.mxu0 0.0
    %2015 = vmatprep.subr.mxu0 0.0
    %2016 = vmatpush1.msra.mxu0 0.0
    %2017 = vmatprep.subr.mxu0 0.0
    %2018 = vmatpush1.msra.mxu0 0.0
    %2019 = vmatprep.subr.mxu0 0.0
    %2020 = vmatpush1.msra.mxu0 0.0
    %2021 = vmatprep.subr.mxu0 0.0
    %2022 = vmatpush1.msra.mxu0 0.0
    %2023 = vmatprep.subr.mxu0 0.0
    %2024 = vmatpush1.msra.mxu0 0.0
    %2025 = vmatprep.subr.mxu0 0.0
    %2026 = vmatpush1.msra.mxu0 0.0
    %2027 = vmatprep.subr.mxu0 0.0
    %2028 = vmatpush1.msra.mxu0 0.0
    %2029 = vmatprep.subr.mxu0 0.0
    %2030 = vmatpush1.msra.mxu0 0.0
    %2031 = vmatprep.subr.mxu0 0.0
    %2032 = vmatpush1.msra.mxu0 0.0
    %2033 = vmatprep.subr.mxu0 0.0
    %2034 = vmatpush1.msra.mxu0 0.0
    %2035 = vmatprep.subr.mxu0 0.0
    %2036 = vmatpush1.msra.mxu0 0.0
    %2037 = vmatprep.subr.mxu0 0.0
    %2038 = vmatpush1.msra.mxu0 0.0
    %2039 = vmatprep.subr.mxu0 0.0
    %2040 = vmatpush1.msra.mxu0 0.0
    %2041 = vmatprep.subr.mxu0 0.0
    %2042 = vmatpush1.msra.mxu0 0.0
    %2043 = vmatprep.subr.mxu0 0.0
    %2044 = vmatpush1.msra.mxu0 0.0
    %2045 = vmatprep.subr.mxu0 0.0
    %2046 = vmatpush1.msra.mxu0 0.0
    %2047 = vmatprep.subr.mxu0 0.0
    %2048 = vmatpush1.msra.mxu0 0.0
    %2049 = vmatprep.subr.mxu0 0.0
    %2050 = vmatpush1.msra.mxu0 0.0
    %2051 = vmatprep.subr.mxu0 0.0
    %2052 = vmatpush1.msra.mxu0 0.0
    %2053 = vmatprep.subr.mxu0 0.0
    %2054 = vmatpush1.msra.mxu0 0.0
    %2055 = vmatprep.subr.mxu0 0.0
    %2056 = vmatpush1.msra.mxu0 0.0
    %2057 = vmatprep.subr.mxu0 0.0
    %2058 = vmatpush1.msra.mxu0 0.0
    %2059 = vmatprep.mubr.f32.mxu0 0.0
    %2060 = vmatmul.mubr.f32.gmra.mrb[0].mxu0 %v1993
    %v2061 = vpop.f32.mrb[0].mxu0
    %v2062 = vadd.f32 %v1990, %v2061
    %v2063 = vpop.f32.mrb[0].mxu0
    %2064 = vdwg.mxu0
    %vm2065 = vcmask 17408
    %2066 = vst.msk [vmem:[#allocation7] sm:$0x3] %vm2065, %v2062
    // Predicated region
    $region18: #{face_detect_forward.1} parent=1 // pred_check
      _
    $region19: #{face_detect_forward.1} parent=1 // pred_check_branch
      %2068 = sbr.rel (0) target = $region21
    $region20: #{face_detect_forward.1} parent=1 // pred_region
      %s2070 = ssub.s32 32, 32
      %2071 = vsyncadd [#allocation4], %s2070
      %s2073 = sshll.u32 [#allocation7], 4
      %s2074 = int_to_ptr.vmem [resolvable:$true] %s2073
      %2076 = dma.vmem_to_hbm [thread:$0]  %s2074, 32, %s2, [#allocation4]
    $region21: #{face_detect_forward.1} parent=1 // pred_fallthru
      _
    // Predicated region
    $region22: #{face_detect_forward.1} parent=1 // pred_check
      _
    $region23: #{face_detect_forward.1} parent=1 // pred_check_branch
      %2078 = sbr.rel (0) target = $region25
    $region24: #{face_detect_forward.1} parent=1 // pred_region
      %2079 = dma.done [#allocation4], 32
    $region25: #{face_detect_forward.1} parent=1 // pred_fallthru
      _
    %2080 = vsyncpa [#allocation3], 1
    %2081 = vsyncpa [#allocation6], 1
    %2082 = vsyncpa [#allocation4], 1

</llo_original>
